<compile_context>
chip_gen: v5e
topology: v5e:2x2
jax: 0.10.0
libtpu: 0.0.40
codegen_flags: <defaults>
</compile_context>

<pallas_src>
import functools
import math

import jax
import jax.numpy as jnp
from jax.experimental import pallas as pl
from jax.experimental.pallas import tpu as pltpu


# ----------------------------- helpers -------------------------------------

def _round_up(x, m):
    return ((x + m - 1) // m) * m


def _layernorm(x, gamma, beta, eps=1e-5):
    mu = jnp.mean(x, axis=-1, keepdims=True)
    var = jnp.mean(jnp.square(x - mu), axis=-1, keepdims=True)
    return (x - mu) * jax.lax.rsqrt(var + eps) * gamma + beta


# ----------------------------- kernels --------------------------------------

def block_kernel(n_head, causal,
                 x_ref, keyb_ref,
                 ln1_g, ln1_b, w_qkv, b_qkv, w_o, b_o,
                 ln2_g, ln2_b, w_1, b_1, w_2, b_2,
                 o_ref):
    """One transformer Block for one batch element and one query tile.

    x_ref   : [L, D]  f32   full (padded) sequence of this batch element
    keyb_ref: [1, L]  f32   additive key bias (-1e9 at padded/masked keys)
    o_ref   : [TQ, D] f32   output rows for this query tile
    weights : resident bf16 (matmuls) / f32 (LN params, biases)
    """
    x = x_ref[...]                                   # [L, D] f32
    L, D = x.shape
    TQ = o_ref.shape[0]
    H = n_head
    Dh = D // H
    scale = 1.0 / math.sqrt(Dh)

    q0 = pl.multiple_of(pl.program_id(1) * TQ, TQ)   # query-tile row offset
    x_q = x_ref[pl.ds(q0, TQ), :]                    # [TQ, D] residual rows

    g1, be1 = ln1_g[...], ln1_b[...]
    h_full = _layernorm(x, g1, be1)                  # [L, D]  (for K, V)
    h_q = _layernorm(x_q, g1, be1)                   # [TQ, D] (for Q)

    w_qkv_v = w_qkv[...]                             # [D, 3D] bf16
    b_qkv_v = b_qkv[...]                             # [1, 3D] f32

    q = jnp.dot(h_q.astype(jnp.bfloat16), w_qkv_v[:, :D],
                preferred_element_type=jnp.float32) + b_qkv_v[:, :D]
    kv = jnp.dot(h_full.astype(jnp.bfloat16), w_qkv_v[:, D:],
                 preferred_element_type=jnp.float32) + b_qkv_v[:, D:]
    k = kv[:, :D]
    v = kv[:, D:]

    # Heads on a leading (batch) axis -> single batched einsums, no lane
    # slicing / concatenation.
    qh = jnp.transpose(q.reshape(TQ, H, Dh), (1, 0, 2))   # [H, TQ, Dh]
    kh = jnp.transpose(k.reshape(L, H, Dh), (1, 0, 2))    # [H, L,  Dh]
    vh = jnp.transpose(v.reshape(L, H, Dh), (1, 0, 2))    # [H, L,  Dh]

    s = jnp.einsum('hqd,hkd->hqk', qh.astype(jnp.bfloat16),
                   kh.astype(jnp.bfloat16),
                   preferred_element_type=jnp.float32) * scale   # [H, TQ, L]

    keyb = keyb_ref[...]                              # [1, L] additive
    s = s + keyb[:, None, :]                          # broadcast over H, TQ
    if causal:
        rows = q0 + jax.lax.broadcasted_iota(jnp.int32, (TQ, L), 0)
        cols = jax.lax.broadcasted_iota(jnp.int32, (TQ, L), 1)
        s = s + jnp.where(cols > rows, -1e9, 0.0)[None]

    # softmax in f32 (VPU/EUP), reciprocal on the EUP slot
    m = jnp.max(s, axis=-1, keepdims=True)
    p = jnp.exp(s - m)
    denom = jnp.sum(p, axis=-1, keepdims=True)
    p = p * pl.reciprocal(denom, approx=True)

    ctx = jnp.einsum('hqk,hkd->hqd', p.astype(jnp.bfloat16),
                     vh.astype(jnp.bfloat16),
                     preferred_element_type=jnp.float32)          # [H, TQ, Dh]
    attn = jnp.transpose(ctx, (1, 0, 2)).reshape(TQ, D)           # [TQ, D]
    attn = jnp.dot(attn.astype(jnp.bfloat16), w_o[...],
                   preferred_element_type=jnp.float32) + b_o[...]

    x1 = x_q + attn                                   # residual 0

    # position-wise FFN (pre-LN, ReLU)
    h2 = _layernorm(x1, ln2_g[...], ln2_b[...])
    f = jnp.dot(h2.astype(jnp.bfloat16), w_1[...],
                preferred_element_type=jnp.float32) + b_1[...]
    f = jnp.maximum(f, 0.0)
    y = jnp.dot(f.astype(jnp.bfloat16), w_2[...],
                preferred_element_type=jnp.float32) + b_2[...]

    o_ref[...] = (x1 + y).astype(o_ref.dtype)         # residual 1


def proj_kernel(x_ref, w_ref, b_ref, o_ref):
    """word_prj tile: logits[tm, tv] = x[tm, D] @ W[D, tv] + b[1, tv]."""
    x = x_ref[...].astype(jnp.bfloat16)
    o_ref[...] = (jnp.dot(x, w_ref[...], preferred_element_type=jnp.float32)
                  + b_ref[...]).astype(o_ref.dtype)


# ----------------------------- wrappers -------------------------------------

_VMEM_LIMIT = 64 * 1024 * 1024   # portable across v5e/v6e (128 MiB) and v7x (64 MiB)


def run_block(x, keyb, p, n_head, causal, tq):
    """x: [B, Lp, D] f32, keyb: [B, 1, Lp] f32 additive key bias."""
    B, Lp, D = x.shape
    n_qt = Lp // tq
    weight_names = ('ln1_g', 'ln1_b', 'w_qkv', 'b_qkv', 'w_o', 'b_o',
                    'ln2_g', 'ln2_b', 'w_1', 'b_1', 'w_2', 'b_2')
    weights = [p[name] for name in weight_names]

    in_specs = [
        # full (padded) sequence of this batch element; resident across q tiles
        pl.BlockSpec((None, Lp, D), lambda b, q: (b, 0, 0)),
        # additive key bias for this batch element
        pl.BlockSpec((None, 1, Lp), lambda b, q: (b, 0, 0)),
    ] + [
        # weights: whole array resident for every grid step
        pl.BlockSpec(tuple(w.shape), lambda b, q: (0, 0)) for w in weights
    ]
    out_spec = pl.BlockSpec((None, tq, D), lambda b, q: (b, q, 0))

    return pl.pallas_call(
        functools.partial(block_kernel, n_head, causal),
        out_shape=jax.ShapeDtypeStruct((B, Lp, D), jnp.float32),
        grid=(B, n_qt),
        in_specs=in_specs,
        out_specs=out_spec,
        compiler_params=pltpu.CompilerParams(
            dimension_semantics=("parallel", "parallel"),
            vmem_limit_bytes=_VMEM_LIMIT),
    )(x, keyb, *weights)


def run_word_prj(x2d, w, b, tm, tv):
    """x2d: [Mp, D] f32, w: [D, Vp] bf16, b: [1, Vp] f32 -> [Mp, Vp] f32."""
    Mp, D = x2d.shape
    Vp = w.shape[1]
    return pl.pallas_call(
        proj_kernel,
        out_shape=jax.ShapeDtypeStruct((Mp, Vp), jnp.float32),
        grid=(Mp // tm, Vp // tv),
        in_specs=[
            pl.BlockSpec((tm, D), lambda i, j: (i, 0)),
            pl.BlockSpec((D, tv), lambda i, j: (0, j)),
            pl.BlockSpec((1, tv), lambda i, j: (0, j)),
        ],
        out_specs=pl.BlockSpec((tm, tv), lambda i, j: (i, j)),
        compiler_params=pltpu.CompilerParams(
            dimension_semantics=("parallel", "parallel"),
            vmem_limit_bytes=_VMEM_LIMIT),
    )(x2d, w, b)


# ----------------------------- parameters -----------------------------------

def sinusoid_pe(max_len, d_model):
    pos = jnp.arange(max_len, dtype=jnp.float32)[:, None]
    div = jnp.exp(jnp.arange(0, d_model, 2, dtype=jnp.float32)
                  * (-math.log(10000.0) / d_model))
    pe = jnp.zeros((max_len, d_model), jnp.float32)
    pe = pe.at[:, 0::2].set(jnp.sin(pos * div))
    pe = pe.at[:, 1::2].set(jnp.cos(pos * div))
    return pe


def init_params(key, voc_size, voc_max_len, d_emb, d_inner, n_layer,
                pad_idx=0):
    keys = jax.random.split(key, 2 + n_layer)
    tok = 0.02 * jax.random.normal(keys[0], (voc_size, d_emb), jnp.float32)
    tok = tok.at[pad_idx].set(0.0)                      # padding_idx row = 0

    blocks = []
    for i in range(n_layer):
        ks = jax.random.split(keys[2 + i], 4)
        blocks.append(dict(
            ln1_g=jnp.ones((1, d_emb), jnp.float32),
            ln1_b=jnp.zeros((1, d_emb), jnp.float32),
            # pre-transposed [in, out] layouts, bf16 for the MXU
            w_qkv=(jax.random.normal(ks[0], (d_emb, 3 * d_emb), jnp.float32)
                   / math.sqrt(d_emb)).astype(jnp.bfloat16),
            b_qkv=jnp.zeros((1, 3 * d_emb), jnp.float32),
            w_o=(jax.random.normal(ks[1], (d_emb, d_emb), jnp.float32)
                 / math.sqrt(d_emb)).astype(jnp.bfloat16),
            b_o=jnp.zeros((1, d_emb), jnp.float32),
            ln2_g=jnp.ones((1, d_emb), jnp.float32),
            ln2_b=jnp.zeros((1, d_emb), jnp.float32),
            w_1=(jax.random.normal(ks[2], (d_emb, d_inner), jnp.float32)
                 / math.sqrt(d_emb)).astype(jnp.bfloat16),
            b_1=jnp.zeros((1, d_inner), jnp.float32),
            w_2=(jax.random.normal(ks[3], (d_inner, d_emb), jnp.float32)
                 / math.sqrt(d_inner)).astype(jnp.bfloat16),
            b_2=jnp.zeros((1, d_emb), jnp.float32),
        ))

    # word_prj: kaiming_normal_(nonlinearity='linear') -> std = 1/sqrt(fan_in);
    # stored pre-transposed [D, V] and padded on the vocab axis to a multiple
    # of 128 for lane-dense logits stores.
    v_pad = _round_up(voc_size, 128)
    wp_w = jnp.zeros((d_emb, v_pad), jnp.float32)
    wp_w = wp_w.at[:, :voc_size].set(
        jax.random.normal(keys[1], (d_emb, voc_size), jnp.float32)
        / math.sqrt(d_emb))
    wp_b = jnp.zeros((1, v_pad), jnp.float32)

    return dict(token_emb=tok,
                pe=sinusoid_pe(voc_max_len + voc_max_len, d_emb),
                blocks=blocks,
                wp_w=wp_w.astype(jnp.bfloat16), wp_b=wp_b,
                voc_size=voc_size)


# ----------------------------- forward --------------------------------------

def gpt2_forward(token_ids_lb, params, *, n_head, key_mask=None, causal=True):
    """token_ids_lb: [L, B] int32 (seq-first, like the PyTorch module).
    key_mask: optional [B, L] bool, True = padded key.
    Returns logits [L, B, voc_size]."""
    L, B = token_ids_lb.shape
    D = params['token_emb'].shape[1]
    V = params['voc_size']

    ids = token_ids_lb.T                                     # [B, L]
    h = jnp.take(params['token_emb'], ids, axis=0)           # embedding (glue)
    h = h + params['pe'][None, :L, :]                        # positional emb

    # sequence padding / query-tile size (8-aligned sublanes)
    Lp = _round_up(L, 8)
    tq = Lp if Lp <= 256 else 256
    Lp = _round_up(Lp, tq)
    if Lp > L:
        h = jnp.pad(h, ((0, 0), (0, Lp - L), (0, 0)))

    # additive key bias [B, 1, Lp]: -1e9 at user-masked and padded keys
    keyb = jnp.zeros((B, L), jnp.float32)
    if key_mask is not None:
        keyb = jnp.where(key_mask, -1e9, 0.0).astype(jnp.float32)
    if Lp > L:
        keyb = jnp.pad(keyb, ((0, 0), (0, Lp - L)), constant_values=-1e9)
    keyb = keyb[:, None, :]

    for blk in params['blocks']:
        h = run_block(h, keyb, blk, n_head, causal, tq)      # [B, Lp, D]
    # NOTE: hidden states round-trip HBM once per layer (accepted / budgeted;
    # full-stack fusion would need manual weight DMA for large models).

    # word projection, tiled over token rows and (128-padded) vocab
    M = B * Lp
    x2d = h.reshape(M, D)
    tm = 256 if M >= 256 else M
    Mp = _round_up(M, tm)
    if Mp > M:
        x2d = jnp.pad(x2d, ((0, Mp - M), (0, 0)))
    Vp = params['wp_w'].shape[1]
    tv = 512 if Vp % 512 == 0 else 128

    logits = run_word_prj(x2d, params['wp_w'], params['wp_b'], tm, tv)
    logits = logits[:M, :V].reshape(B, Lp, V)[:, :L, :]      # drop padding
    return jnp.transpose(logits, (1, 0, 2))                  # [L, B, V]


# ----------------------------- demo ------------------------------------------

if __name__ == "__main__":
    voc_size, voc_max_len = 16, 8
    d_emb, n_head, d_inner, n_layer = 32, 4, 64, 2
    L, B = 8, 2

    key = jax.random.PRNGKey(0)
    k_params, k_ids = jax.random.split(key)
    params = init_params(k_params, voc_size, voc_max_len, d_emb, d_inner,
                         n_layer, pad_idx=0)

    token_ids = jax.random.randint(k_ids, (L, B), 1, voc_size, dtype=jnp.int32)

    # Causal (square-subsequent) mask is generated in-kernel (causal=True).
    out = gpt2_forward(token_ids, params, n_head=n_head, key_mask=None,
                       causal=True)
    out = jax.block_until_ready(out)

    assert out.shape == (L, B, voc_size), out.shape
    assert bool(jnp.all(jnp.isfinite(out)))
    print("KERNEL_OK")
</pallas_src>

<mosaic_0001>
module attributes {stable_mosaic.version = 11 : i64} {
  func.func @block_kernel(%arg0: i32, %arg1: i32, %arg2: memref<1x8x32xf32, #tpu.memory_space<vmem>>, %arg3: memref<1x1x8xf32, #tpu.memory_space<vmem>>, %arg4: memref<1x32xf32, #tpu.memory_space<vmem>>, %arg5: memref<1x32xf32, #tpu.memory_space<vmem>>, %arg6: memref<32x96xbf16, #tpu.memory_space<vmem>>, %arg7: memref<1x96xf32, #tpu.memory_space<vmem>>, %arg8: memref<32x32xbf16, #tpu.memory_space<vmem>>, %arg9: memref<1x32xf32, #tpu.memory_space<vmem>>, %arg10: memref<1x32xf32, #tpu.memory_space<vmem>>, %arg11: memref<1x32xf32, #tpu.memory_space<vmem>>, %arg12: memref<32x64xbf16, #tpu.memory_space<vmem>>, %arg13: memref<1x64xf32, #tpu.memory_space<vmem>>, %arg14: memref<64x32xbf16, #tpu.memory_space<vmem>>, %arg15: memref<1x32xf32, #tpu.memory_space<vmem>>, %arg16: memref<1x8x32xf32, #tpu.memory_space<vmem>>) attributes {dimension_semantics = [#tpu.dimension_semantics<parallel>, #tpu.dimension_semantics<parallel>], iteration_bounds = array<i64: 2, 1>, scalar_prefetch = 0 : i64, scratch_operands = 0 : i64, tpu.core_type = #tpu.core_type<tc>, window_params = [{transform_indices = @transform_0, window_bounds = array<i64: 1, 8, 32>}, {transform_indices = @transform_1, window_bounds = array<i64: 1, 1, 8>}, {pipeline_mode = #tpu.pipeline_mode<synchronous>, transform_indices = @transform_2, window_bounds = array<i64: 1, 32>}, {pipeline_mode = #tpu.pipeline_mode<synchronous>, transform_indices = @transform_3, window_bounds = array<i64: 1, 32>}, {pipeline_mode = #tpu.pipeline_mode<synchronous>, transform_indices = @transform_4, window_bounds = array<i64: 32, 96>}, {pipeline_mode = #tpu.pipeline_mode<synchronous>, transform_indices = @transform_5, window_bounds = array<i64: 1, 96>}, {pipeline_mode = #tpu.pipeline_mode<synchronous>, transform_indices = @transform_6, window_bounds = array<i64: 32, 32>}, {pipeline_mode = #tpu.pipeline_mode<synchronous>, transform_indices = @transform_7, window_bounds = array<i64: 1, 32>}, {pipeline_mode = #tpu.pipeline_mode<synchronous>, transform_indices = @transform_8, window_bounds = array<i64: 1, 32>}, {pipeline_mode = #tpu.pipeline_mode<synchronous>, transform_indices = @transform_9, window_bounds = array<i64: 1, 32>}, {pipeline_mode = #tpu.pipeline_mode<synchronous>, transform_indices = @transform_10, window_bounds = array<i64: 32, 64>}, {pipeline_mode = #tpu.pipeline_mode<synchronous>, transform_indices = @transform_11, window_bounds = array<i64: 1, 64>}, {pipeline_mode = #tpu.pipeline_mode<synchronous>, transform_indices = @transform_12, window_bounds = array<i64: 64, 32>}, {pipeline_mode = #tpu.pipeline_mode<synchronous>, transform_indices = @transform_13, window_bounds = array<i64: 1, 32>}, {transform_indices = @transform_14, window_bounds = array<i64: 1, 8, 32>}]} {
    %c0 = arith.constant 0 : index
    %c0_0 = arith.constant 0 : index
    %c0_1 = arith.constant 0 : index
    %0 = vector.load %arg2[%c0, %c0_0, %c0_1] : memref<1x8x32xf32, #tpu.memory_space<vmem>>, vector<1x8x32xf32>
    %1 = vector.shape_cast %0 : vector<1x8x32xf32> to vector<8x32xf32>
    %c8_i32 = arith.constant 8 : i32
    %2 = arith.muli %arg1, %c8_i32 : i32
    %3 = tpu.assume_multiple %2, 8 : i32
    %c0_2 = arith.constant 0 : index
    %4 = arith.index_cast %3 : i32 to index
    %c0_3 = arith.constant 0 : index
    %5 = vector.load %arg2[%c0_2, %4, %c0_3] : memref<1x8x32xf32, #tpu.memory_space<vmem>>, vector<1x8x32xf32>
    %6 = vector.shape_cast %5 : vector<1x8x32xf32> to vector<8x32xf32>
    %c0_4 = arith.constant 0 : index
    %c0_5 = arith.constant 0 : index
    %7 = vector.load %arg4[%c0_4, %c0_5] : memref<1x32xf32, #tpu.memory_space<vmem>>, vector<1x32xf32>
    %c0_6 = arith.constant 0 : index
    %c0_7 = arith.constant 0 : index
    %8 = vector.load %arg5[%c0_6, %c0_7] : memref<1x32xf32, #tpu.memory_space<vmem>>, vector<1x32xf32>
    %cst = arith.constant dense<0.000000e+00> : vector<8xf32>
    %9 = vector.multi_reduction <add>, %1, %cst [1] : vector<8x32xf32> to vector<8xf32>
    %10 = vector.shape_cast %9 : vector<8xf32> to vector<8x1xf32>
    %cst_8 = arith.constant 3.200000e+01 : f32
    %11 = vector.broadcast %cst_8 : f32 to vector<8x1xf32>
    %12 = arith.divf %10, %11 : vector<8x1xf32>
    %13 = vector.broadcast %12 : vector<8x1xf32> to vector<8x32xf32>
    %14 = arith.subf %1, %13 : vector<8x32xf32>
    %15 = arith.mulf %14, %14 : vector<8x32xf32>
    %cst_9 = arith.constant dense<0.000000e+00> : vector<8xf32>
    %16 = vector.multi_reduction <add>, %15, %cst_9 [1] : vector<8x32xf32> to vector<8xf32>
    %17 = vector.shape_cast %16 : vector<8xf32> to vector<8x1xf32>
    %cst_10 = arith.constant 3.200000e+01 : f32
    %18 = vector.broadcast %cst_10 : f32 to vector<8x1xf32>
    %19 = arith.divf %17, %18 : vector<8x1xf32>
    %20 = vector.broadcast %12 : vector<8x1xf32> to vector<8x32xf32>
    %21 = arith.subf %1, %20 : vector<8x32xf32>
    %cst_11 = arith.constant 9.99999974E-6 : f32
    %22 = vector.broadcast %cst_11 : f32 to vector<8x1xf32>
    %23 = arith.addf %19, %22 : vector<8x1xf32>
    %24 = math.rsqrt %23 : vector<8x1xf32>
    %25 = vector.broadcast %24 : vector<8x1xf32> to vector<8x32xf32>
    %26 = arith.mulf %21, %25 : vector<8x32xf32>
    %27 = vector.broadcast %7 : vector<1x32xf32> to vector<8x32xf32>
    %28 = arith.mulf %26, %27 : vector<8x32xf32>
    %29 = vector.broadcast %8 : vector<1x32xf32> to vector<8x32xf32>
    %30 = arith.addf %28, %29 : vector<8x32xf32>
    %cst_12 = arith.constant dense<0.000000e+00> : vector<8xf32>
    %31 = vector.multi_reduction <add>, %6, %cst_12 [1] : vector<8x32xf32> to vector<8xf32>
    %32 = vector.shape_cast %31 : vector<8xf32> to vector<8x1xf32>
    %cst_13 = arith.constant 3.200000e+01 : f32
    %33 = vector.broadcast %cst_13 : f32 to vector<8x1xf32>
    %34 = arith.divf %32, %33 : vector<8x1xf32>
    %35 = vector.broadcast %34 : vector<8x1xf32> to vector<8x32xf32>
    %36 = arith.subf %6, %35 : vector<8x32xf32>
    %37 = arith.mulf %36, %36 : vector<8x32xf32>
    %cst_14 = arith.constant dense<0.000000e+00> : vector<8xf32>
    %38 = vector.multi_reduction <add>, %37, %cst_14 [1] : vector<8x32xf32> to vector<8xf32>
    %39 = vector.shape_cast %38 : vector<8xf32> to vector<8x1xf32>
    %cst_15 = arith.constant 3.200000e+01 : f32
    %40 = vector.broadcast %cst_15 : f32 to vector<8x1xf32>
    %41 = arith.divf %39, %40 : vector<8x1xf32>
    %42 = vector.broadcast %34 : vector<8x1xf32> to vector<8x32xf32>
    %43 = arith.subf %6, %42 : vector<8x32xf32>
    %cst_16 = arith.constant 9.99999974E-6 : f32
    %44 = vector.broadcast %cst_16 : f32 to vector<8x1xf32>
    %45 = arith.addf %41, %44 : vector<8x1xf32>
    %46 = math.rsqrt %45 : vector<8x1xf32>
    %47 = vector.broadcast %46 : vector<8x1xf32> to vector<8x32xf32>
    %48 = arith.mulf %43, %47 : vector<8x32xf32>
    %49 = vector.broadcast %7 : vector<1x32xf32> to vector<8x32xf32>
    %50 = arith.mulf %48, %49 : vector<8x32xf32>
    %51 = vector.broadcast %8 : vector<1x32xf32> to vector<8x32xf32>
    %52 = arith.addf %50, %51 : vector<8x32xf32>
    %c0_17 = arith.constant 0 : index
    %c0_18 = arith.constant 0 : index
    %53 = vector.load %arg6[%c0_17, %c0_18] : memref<32x96xbf16, #tpu.memory_space<vmem>>, vector<32x96xbf16>
    %c0_19 = arith.constant 0 : index
    %c0_20 = arith.constant 0 : index
    %54 = vector.load %arg7[%c0_19, %c0_20] : memref<1x96xf32, #tpu.memory_space<vmem>>, vector<1x96xf32>
    %55 = arith.truncf %52 : vector<8x32xf32> to vector<8x32xbf16>
    %56 = vector.extract_strided_slice %53 {offsets = [0, 0], sizes = [32, 32], strides = [1, 1]} : vector<32x96xbf16> to vector<32x32xbf16>
    %cst_21 = arith.constant dense<0.000000e+00> : vector<8x32xf32>
    %57 = tpu.matmul %55, %56, %cst_21 {dimension_numbers = #tpu.dot_dimension_numbers<[1], [0], [0], [1], [0, 0, 1, 1], [], []>} : vector<8x32xbf16>, vector<32x32xbf16>, vector<8x32xf32> -> vector<8x32xf32>
    %58 = vector.extract_strided_slice %54 {offsets = [0, 0], sizes = [1, 32], strides = [1, 1]} : vector<1x96xf32> to vector<1x32xf32>
    %59 = vector.broadcast %58 : vector<1x32xf32> to vector<8x32xf32>
    %60 = arith.addf %57, %59 : vector<8x32xf32>
    %61 = arith.truncf %30 : vector<8x32xf32> to vector<8x32xbf16>
    %62 = vector.extract_strided_slice %53 {offsets = [0, 32], sizes = [32, 64], strides = [1, 1]} : vector<32x96xbf16> to vector<32x64xbf16>
    %cst_22 = arith.constant dense<0.000000e+00> : vector<8x64xf32>
    %63 = tpu.matmul %61, %62, %cst_22 {dimension_numbers = #tpu.dot_dimension_numbers<[1], [0], [0], [1], [0, 0, 1, 1], [], []>} : vector<8x32xbf16>, vector<32x64xbf16>, vector<8x64xf32> -> vector<8x64xf32>
    %64 = vector.extract_strided_slice %54 {offsets = [0, 32], sizes = [1, 64], strides = [1, 1]} : vector<1x96xf32> to vector<1x64xf32>
    %65 = vector.broadcast %64 : vector<1x64xf32> to vector<8x64xf32>
    %66 = arith.addf %63, %65 : vector<8x64xf32>
    %67 = vector.extract_strided_slice %66 {offsets = [0, 0], sizes = [8, 32], strides = [1, 1]} : vector<8x64xf32> to vector<8x32xf32>
    %68 = vector.extract_strided_slice %66 {offsets = [0, 32], sizes = [8, 32], strides = [1, 1]} : vector<8x64xf32> to vector<8x32xf32>
    %69 = vector.shape_cast %60 : vector<8x32xf32> to vector<8x4x8xf32>
    %70 = tpu.transpose %69, [1, 0, 2] : vector<8x4x8xf32> -> vector<4x8x8xf32>
    %71 = vector.shape_cast %67 : vector<8x32xf32> to vector<8x4x8xf32>
    %72 = tpu.transpose %71, [1, 0, 2] : vector<8x4x8xf32> -> vector<4x8x8xf32>
    %73 = vector.shape_cast %68 : vector<8x32xf32> to vector<8x4x8xf32>
    %74 = tpu.transpose %73, [1, 0, 2] : vector<8x4x8xf32> -> vector<4x8x8xf32>
    %75 = arith.truncf %70 : vector<4x8x8xf32> to vector<4x8x8xbf16>
    %76 = arith.truncf %72 : vector<4x8x8xf32> to vector<4x8x8xbf16>
    "tpu.trace_start"() <{level = 10 : i32, message = "hqd,hkd->hqk"}> : () -> ()
    %cst_23 = arith.constant dense<0.000000e+00> : vector<4x8x8xf32>
    %77 = tpu.matmul %75, %76, %cst_23 {dimension_numbers = #tpu.dot_dimension_numbers<[2], [2], [1], [1], [0, 0, 0, 1, 1, 1], [0], [0]>} : vector<4x8x8xbf16>, vector<4x8x8xbf16>, vector<4x8x8xf32> -> vector<4x8x8xf32>
    "tpu.trace_stop"() : () -> ()
    %cst_24 = arith.constant 0.353553385 : f32
    %78 = vector.broadcast %cst_24 : f32 to vector<4x8x8xf32>
    %79 = arith.mulf %77, %78 : vector<4x8x8xf32>
    %c0_25 = arith.constant 0 : index
    %c0_26 = arith.constant 0 : index
    %c0_27 = arith.constant 0 : index
    %80 = vector.load %arg3[%c0_25, %c0_26, %c0_27] : memref<1x1x8xf32, #tpu.memory_space<vmem>>, vector<1x1x8xf32>
    %81 = vector.shape_cast %80 : vector<1x1x8xf32> to vector<1x8xf32>
    %82 = vector.shape_cast %81 : vector<1x8xf32> to vector<1x1x8xf32>
    %83 = vector.broadcast %82 : vector<1x1x8xf32> to vector<4x8x8xf32>
    %84 = arith.addf %79, %83 : vector<4x8x8xf32>
    %85 = tpu.iota {dimensions = array<i32: 0>} : vector<8x8xi32>
    %86 = vector.broadcast %3 : i32 to vector<8x8xi32>
    %87 = arith.addi %86, %85 : vector<8x8xi32>
    %88 = tpu.iota {dimensions = array<i32: 1>} : vector<8x8xi32>
    %89 = arith.cmpi sgt, %88, %87 : vector<8x8xi32>
    %cst_28 = arith.constant -1.000000e+09 : f32
    %cst_29 = arith.constant 0.000000e+00 : f32
    %90 = vector.broadcast %cst_28 : f32 to vector<8x8xf32>
    %91 = vector.broadcast %cst_29 : f32 to vector<8x8xf32>
    %92 = arith.select %89, %90, %91 : vector<8x8xi1>, vector<8x8xf32>
    %93 = vector.shape_cast %92 : vector<8x8xf32> to vector<1x8x8xf32>
    %94 = vector.broadcast %93 : vector<1x8x8xf32> to vector<4x8x8xf32>
    %95 = arith.addf %84, %94 : vector<4x8x8xf32>
    %cst_30 = arith.constant dense<0xFF800000> : vector<4x8xf32>
    %96 = vector.multi_reduction <maximumf>, %95, %cst_30 [2] : vector<4x8x8xf32> to vector<4x8xf32>
    %97 = vector.shape_cast %96 : vector<4x8xf32> to vector<4x8x1xf32>
    %98 = vector.broadcast %97 : vector<4x8x1xf32> to vector<4x8x8xf32>
    %99 = arith.subf %95, %98 : vector<4x8x8xf32>
    %100 = math.exp %99 : vector<4x8x8xf32>
    %cst_31 = arith.constant dense<0.000000e+00> : vector<4x8xf32>
    %101 = vector.multi_reduction <add>, %100, %cst_31 [2] : vector<4x8x8xf32> to vector<4x8xf32>
    %102 = vector.shape_cast %101 : vector<4x8xf32> to vector<4x8x1xf32>
    %103 = tpu.reciprocal %102 {approx = true} : vector<4x8x1xf32> -> vector<4x8x1xf32>
    %104 = vector.broadcast %103 : vector<4x8x1xf32> to vector<4x8x8xf32>
    %105 = arith.mulf %100, %104 : vector<4x8x8xf32>
    %106 = arith.truncf %105 : vector<4x8x8xf32> to vector<4x8x8xbf16>
    %107 = arith.truncf %74 : vector<4x8x8xf32> to vector<4x8x8xbf16>
    "tpu.trace_start"() <{level = 10 : i32, message = "hqk,hkd->hqd"}> : () -> ()
    %cst_32 = arith.constant dense<0.000000e+00> : vector<4x8x8xf32>
    %108 = tpu.matmul %106, %107, %cst_32 {dimension_numbers = #tpu.dot_dimension_numbers<[2], [1], [1], [2], [0, 0, 0, 1, 1, 2], [0], [0]>} : vector<4x8x8xbf16>, vector<4x8x8xbf16>, vector<4x8x8xf32> -> vector<4x8x8xf32>
    "tpu.trace_stop"() : () -> ()
    %109 = tpu.transpose %108, [1, 0, 2] : vector<4x8x8xf32> -> vector<8x4x8xf32>
    %110 = vector.shape_cast %109 : vector<8x4x8xf32> to vector<8x32xf32>
    %111 = arith.truncf %110 : vector<8x32xf32> to vector<8x32xbf16>
    %c0_33 = arith.constant 0 : index
    %c0_34 = arith.constant 0 : index
    %112 = vector.load %arg8[%c0_33, %c0_34] : memref<32x32xbf16, #tpu.memory_space<vmem>>, vector<32x32xbf16>
    %cst_35 = arith.constant dense<0.000000e+00> : vector<8x32xf32>
    %113 = tpu.matmul %111, %112, %cst_35 {dimension_numbers = #tpu.dot_dimension_numbers<[1], [0], [0], [1], [0, 0, 1, 1], [], []>} : vector<8x32xbf16>, vector<32x32xbf16>, vector<8x32xf32> -> vector<8x32xf32>
    %c0_36 = arith.constant 0 : index
    %c0_37 = arith.constant 0 : index
    %114 = vector.load %arg9[%c0_36, %c0_37] : memref<1x32xf32, #tpu.memory_space<vmem>>, vector<1x32xf32>
    %115 = vector.broadcast %114 : vector<1x32xf32> to vector<8x32xf32>
    %116 = arith.addf %113, %115 : vector<8x32xf32>
    %117 = arith.addf %6, %116 : vector<8x32xf32>
    %c0_38 = arith.constant 0 : index
    %c0_39 = arith.constant 0 : index
    %118 = vector.load %arg10[%c0_38, %c0_39] : memref<1x32xf32, #tpu.memory_space<vmem>>, vector<1x32xf32>
    %c0_40 = arith.constant 0 : index
    %c0_41 = arith.constant 0 : index
    %119 = vector.load %arg11[%c0_40, %c0_41] : memref<1x32xf32, #tpu.memory_space<vmem>>, vector<1x32xf32>
    %cst_42 = arith.constant dense<0.000000e+00> : vector<8xf32>
    %120 = vector.multi_reduction <add>, %117, %cst_42 [1] : vector<8x32xf32> to vector<8xf32>
    %121 = vector.shape_cast %120 : vector<8xf32> to vector<8x1xf32>
    %cst_43 = arith.constant 3.200000e+01 : f32
    %122 = vector.broadcast %cst_43 : f32 to vector<8x1xf32>
    %123 = arith.divf %121, %122 : vector<8x1xf32>
    %124 = vector.broadcast %123 : vector<8x1xf32> to vector<8x32xf32>
    %125 = arith.subf %117, %124 : vector<8x32xf32>
    %126 = arith.mulf %125, %125 : vector<8x32xf32>
    %cst_44 = arith.constant dense<0.000000e+00> : vector<8xf32>
    %127 = vector.multi_reduction <add>, %126, %cst_44 [1] : vector<8x32xf32> to vector<8xf32>
    %128 = vector.shape_cast %127 : vector<8xf32> to vector<8x1xf32>
    %cst_45 = arith.constant 3.200000e+01 : f32
    %129 = vector.broadcast %cst_45 : f32 to vector<8x1xf32>
    %130 = arith.divf %128, %129 : vector<8x1xf32>
    %131 = vector.broadcast %123 : vector<8x1xf32> to vector<8x32xf32>
    %132 = arith.subf %117, %131 : vector<8x32xf32>
    %cst_46 = arith.constant 9.99999974E-6 : f32
    %133 = vector.broadcast %cst_46 : f32 to vector<8x1xf32>
    %134 = arith.addf %130, %133 : vector<8x1xf32>
    %135 = math.rsqrt %134 : vector<8x1xf32>
    %136 = vector.broadcast %135 : vector<8x1xf32> to vector<8x32xf32>
    %137 = arith.mulf %132, %136 : vector<8x32xf32>
    %138 = vector.broadcast %118 : vector<1x32xf32> to vector<8x32xf32>
    %139 = arith.mulf %137, %138 : vector<8x32xf32>
    %140 = vector.broadcast %119 : vector<1x32xf32> to vector<8x32xf32>
    %141 = arith.addf %139, %140 : vector<8x32xf32>
    %142 = arith.truncf %141 : vector<8x32xf32> to vector<8x32xbf16>
    %c0_47 = arith.constant 0 : index
    %c0_48 = arith.constant 0 : index
    %143 = vector.load %arg12[%c0_47, %c0_48] : memref<32x64xbf16, #tpu.memory_space<vmem>>, vector<32x64xbf16>
    %cst_49 = arith.constant dense<0.000000e+00> : vector<8x64xf32>
    %144 = tpu.matmul %142, %143, %cst_49 {dimension_numbers = #tpu.dot_dimension_numbers<[1], [0], [0], [1], [0, 0, 1, 1], [], []>} : vector<8x32xbf16>, vector<32x64xbf16>, vector<8x64xf32> -> vector<8x64xf32>
    %c0_50 = arith.constant 0 : index
    %c0_51 = arith.constant 0 : index
    %145 = vector.load %arg13[%c0_50, %c0_51] : memref<1x64xf32, #tpu.memory_space<vmem>>, vector<1x64xf32>
    %146 = vector.broadcast %145 : vector<1x64xf32> to vector<8x64xf32>
    %147 = arith.addf %144, %146 : vector<8x64xf32>
    %cst_52 = arith.constant 0.000000e+00 : f32
    %148 = vector.broadcast %cst_52 : f32 to vector<8x64xf32>
    %149 = arith.maximumf %147, %148 : vector<8x64xf32>
    %150 = arith.truncf %149 : vector<8x64xf32> to vector<8x64xbf16>
    %c0_53 = arith.constant 0 : index
    %c0_54 = arith.constant 0 : index
    %151 = vector.load %arg14[%c0_53, %c0_54] : memref<64x32xbf16, #tpu.memory_space<vmem>>, vector<64x32xbf16>
    %cst_55 = arith.constant dense<0.000000e+00> : vector<8x32xf32>
    %152 = tpu.matmul %150, %151, %cst_55 {dimension_numbers = #tpu.dot_dimension_numbers<[1], [0], [0], [1], [0, 0, 1, 1], [], []>} : vector<8x64xbf16>, vector<64x32xbf16>, vector<8x32xf32> -> vector<8x32xf32>
    %c0_56 = arith.constant 0 : index
    %c0_57 = arith.constant 0 : index
    %153 = vector.load %arg15[%c0_56, %c0_57] : memref<1x32xf32, #tpu.memory_space<vmem>>, vector<1x32xf32>
    %154 = vector.broadcast %153 : vector<1x32xf32> to vector<8x32xf32>
    %155 = arith.addf %152, %154 : vector<8x32xf32>
    %156 = arith.addf %117, %155 : vector<8x32xf32>
    %c0_58 = arith.constant 0 : index
    %c0_59 = arith.constant 0 : index
    %c0_60 = arith.constant 0 : index
    %157 = vector.load %arg16[%c0_58, %c0_59, %c0_60] : memref<1x8x32xf32, #tpu.memory_space<vmem>>, vector<1x8x32xf32>
    %158 = vector.shape_cast %157 : vector<1x8x32xf32> to vector<8x32xf32>
    %159 = vector.shape_cast %156 : vector<8x32xf32> to vector<1x8x32xf32>
    tpu.vector_store %arg16[%c0_58, %c0_59, %c0_60], %159 {strides = array<i32>} : memref<1x8x32xf32, #tpu.memory_space<vmem>>, vector<1x8x32xf32>,
    return
  }
  func.func @transform_0(%arg0: i32, %arg1: i32) -> (i32, i32, i32) {
    %c0_i32 = arith.constant 0 : i32
    %c0_i32_0 = arith.constant 0 : i32
    %c0_i32_1 = arith.constant 0 : i32
    return %arg0, %c0_i32, %c0_i32_0 : i32, i32, i32
  }
  func.func @transform_1(%arg0: i32, %arg1: i32) -> (i32, i32, i32) {
    %c0_i32 = arith.constant 0 : i32
    %c0_i32_0 = arith.constant 0 : i32
    %c0_i32_1 = arith.constant 0 : i32
    return %arg0, %c0_i32, %c0_i32_0 : i32, i32, i32
  }
  func.func @transform_2(%arg0: i32, %arg1: i32) -> (i32, i32) {
    %c0_i32 = arith.constant 0 : i32
    %c0_i32_0 = arith.constant 0 : i32
    %c0_i32_1 = arith.constant 0 : i32
    return %c0_i32, %c0_i32_0 : i32, i32
  }
  func.func @transform_3(%arg0: i32, %arg1: i32) -> (i32, i32) {
    %c0_i32 = arith.constant 0 : i32
    %c0_i32_0 = arith.constant 0 : i32
    %c0_i32_1 = arith.constant 0 : i32
    return %c0_i32, %c0_i32_0 : i32, i32
  }
  func.func @transform_4(%arg0: i32, %arg1: i32) -> (i32, i32) {
    %c0_i32 = arith.constant 0 : i32
    %c0_i32_0 = arith.constant 0 : i32
    %c0_i32_1 = arith.constant 0 : i32
    return %c0_i32, %c0_i32_0 : i32, i32
  }
  func.func @transform_5(%arg0: i32, %arg1: i32) -> (i32, i32) {
    %c0_i32 = arith.constant 0 : i32
    %c0_i32_0 = arith.constant 0 : i32
    %c0_i32_1 = arith.constant 0 : i32
    return %c0_i32, %c0_i32_0 : i32, i32
  }
  func.func @transform_6(%arg0: i32, %arg1: i32) -> (i32, i32) {
    %c0_i32 = arith.constant 0 : i32
    %c0_i32_0 = arith.constant 0 : i32
    %c0_i32_1 = arith.constant 0 : i32
    return %c0_i32, %c0_i32_0 : i32, i32
  }
  func.func @transform_7(%arg0: i32, %arg1: i32) -> (i32, i32) {
    %c0_i32 = arith.constant 0 : i32
    %c0_i32_0 = arith.constant 0 : i32
    %c0_i32_1 = arith.constant 0 : i32
    return %c0_i32, %c0_i32_0 : i32, i32
  }
  func.func @transform_8(%arg0: i32, %arg1: i32) -> (i32, i32) {
    %c0_i32 = arith.constant 0 : i32
    %c0_i32_0 = arith.constant 0 : i32
    %c0_i32_1 = arith.constant 0 : i32
    return %c0_i32, %c0_i32_0 : i32, i32
  }
  func.func @transform_9(%arg0: i32, %arg1: i32) -> (i32, i32) {
    %c0_i32 = arith.constant 0 : i32
    %c0_i32_0 = arith.constant 0 : i32
    %c0_i32_1 = arith.constant 0 : i32
    return %c0_i32, %c0_i32_0 : i32, i32
  }
  func.func @transform_10(%arg0: i32, %arg1: i32) -> (i32, i32) {
    %c0_i32 = arith.constant 0 : i32
    %c0_i32_0 = arith.constant 0 : i32
    %c0_i32_1 = arith.constant 0 : i32
    return %c0_i32, %c0_i32_0 : i32, i32
  }
  func.func @transform_11(%arg0: i32, %arg1: i32) -> (i32, i32) {
    %c0_i32 = arith.constant 0 : i32
    %c0_i32_0 = arith.constant 0 : i32
    %c0_i32_1 = arith.constant 0 : i32
    return %c0_i32, %c0_i32_0 : i32, i32
  }
  func.func @transform_12(%arg0: i32, %arg1: i32) -> (i32, i32) {
    %c0_i32 = arith.constant 0 : i32
    %c0_i32_0 = arith.constant 0 : i32
    %c0_i32_1 = arith.constant 0 : i32
    return %c0_i32, %c0_i32_0 : i32, i32
  }
  func.func @transform_13(%arg0: i32, %arg1: i32) -> (i32, i32) {
    %c0_i32 = arith.constant 0 : i32
    %c0_i32_0 = arith.constant 0 : i32
    %c0_i32_1 = arith.constant 0 : i32
    return %c0_i32, %c0_i32_0 : i32, i32
  }
  func.func @transform_14(%arg0: i32, %arg1: i32) -> (i32, i32, i32) {
    %c0_i32 = arith.constant 0 : i32
    %c0_i32_0 = arith.constant 0 : i32
    return %arg0, %arg1, %c0_i32 : i32, i32, i32
  }
}

</mosaic_0001>

<llo_original>
// kernel: tpu_custom_call.1
$region0: #{tpu_custom_call.1}
  #allocation0 [shape = 'u32[]', space=smem, size = 0x4, offset = 0x4, fixed_abs, tag = 'smem constant byte address 0x4 - core index']
  #allocation1 [shape = 'u32[72,128]{1,0:T(1,128)}', space=vmem, size = 0x9000, scoped, tag = 'internal scratch']
  %s0 = inlined_call_operand.vmem [shape: f32[2,8,32], index: 0, kind: input, shape index: {}]
  %s1 = inlined_call_operand.hbm [shape: f32[2,1,8], index: 1, kind: input, shape index: {}]
  %s2 = inlined_call_operand.vmem [shape: f32[1,32], index: 2, kind: input, shape index: {}]
  %s3 = inlined_call_operand.vmem [shape: f32[1,32], index: 3, kind: input, shape index: {}]
  %s4 = inlined_call_operand.vmem [shape: bf16[32,96], index: 4, kind: input, shape index: {}]
  %s5 = inlined_call_operand.vmem [shape: f32[1,96], index: 5, kind: input, shape index: {}]
  %s6 = inlined_call_operand.vmem [shape: bf16[32,32], index: 6, kind: input, shape index: {}]
  %s7 = inlined_call_operand.vmem [shape: f32[1,32], index: 7, kind: input, shape index: {}]
  %s8 = inlined_call_operand.vmem [shape: f32[1,32], index: 8, kind: input, shape index: {}]
  %s9 = inlined_call_operand.vmem [shape: f32[1,32], index: 9, kind: input, shape index: {}]
  %s10 = inlined_call_operand.hbm [shape: bf16[32,64], index: 10, kind: input, shape index: {}]
  %s11 = inlined_call_operand.vmem [shape: f32[1,64], index: 11, kind: input, shape index: {}]
  %s12 = inlined_call_operand.vmem [shape: bf16[64,32], index: 12, kind: input, shape index: {}]
  %s13 = inlined_call_operand.vmem [shape: f32[1,32], index: 13, kind: input, shape index: {}]
  %s14 = inlined_call_operand.hbm [shape: f32[2,8,32], index: 14, kind: output, shape index: {}]
  %s15 = sld [smem:[#allocation0]]
  $region97: #{tpu_custom_call.1} parent=0
    _
  %s17 = ssub.s32 1, %s15
  %s18 = scalar_select 0, %s17, %s15
  $region1: #{tpu_custom_call.1} parent=0
    #allocation2 [shape = 'u8[1024]{0}', space=vmem, size = 0x400, scoped, tag = 'input window, operand 1']
    #allocation3 [shape = 's32[2]{0}', space=sflag, size = 0x8, scoped, tag = 'scoped memory for tpu_custom_call.1']
    #allocation4 [shape = 's32[2]{0}', space=sflag, size = 0x8, scoped, tag = 'scoped memory for tpu_custom_call.1']
    #allocation5 [shape = 'u8[8192]{0}', space=vmem, size = 0x2000, scoped, tag = 'input window, operand 10, single buffered']
    #allocation6 [shape = 's32[1]{0}', space=sflag, size = 0x4, scoped, tag = 'scoped memory for tpu_custom_call.1']
    #allocation7 [shape = 'u8[8192]{0}', space=vmem, size = 0x2000, scoped, tag = 'output window, operand 0']
    %19 = vsyncpa [#allocation3], 0
    %s20 = scalar_lea.sflag [#allocation3], 1
    %21 = vsyncpa %s20, 0
    %22 = vsyncpa [#allocation6], 0
    %23 = vsyncpa [#allocation4], 0
    %s24 = scalar_lea.sflag [#allocation4], 1
    %25 = vsyncpa %s24, 0
    loop: start=0, step=1, limit=4
    $region2: #{tpu_custom_call.1} parent=1 // loop_pre_header
      _
    $region3: #{tpu_custom_call.1} parent=1 // loop_header
      %s27 = sphi 0, %s31
      %p28 = scmp.ge.s32.totalorder %s27, 4
      %s34 = sphi 0, %s46
      %s35 = sphi 0, %s42
      %s36 = sphi 0, %s34
      %s37 = sphi 0, %s35
      %s38 = sphi 0, %s36
      %s39 = sphi 0, %s37
      %s49 = sphi 0, %s51
      %s52 = sphi 0, %s49
      %s53 = sphi 0, %s52
      %s69 = sphi 0, %s53
      %s75 = sphi 0, %s77
      %s78 = sphi 0, %s75
      %s79 = sphi 0, %s78
      %s95 = sphi 0, %s79
      %s99 = sphi 0, %s99
      %s101 = sphi 0, %s99
      %s102 = sphi 0, %s101
      %s116 = sphi 0, %s102
      %s120 = sphi 0, %s120
      %s122 = sphi 0, %s120
      %s123 = sphi 0, %s122
      %s137 = sphi 0, %s123
      %s141 = sphi 0, %s141
      %s143 = sphi 0, %s141
      %s144 = sphi 0, %s143
      %s158 = sphi 0, %s144
      %s162 = sphi 0, %s162
      %s164 = sphi 0, %s162
      %s165 = sphi 0, %s164
      %s179 = sphi 0, %s165
      %s183 = sphi 0, %s183
      %s185 = sphi 0, %s183
      %s186 = sphi 0, %s185
      %s200 = sphi 0, %s186
      %s204 = sphi 0, %s204
      %s206 = sphi 0, %s204
      %s207 = sphi 0, %s206
      %s221 = sphi 0, %s207
      %s225 = sphi 0, %s225
      %s227 = sphi 0, %s225
      %s228 = sphi 0, %s227
      %s242 = sphi 0, %s228
      %s246 = sphi 0, %s246
      %s248 = sphi 0, %s246
      %s249 = sphi 0, %s248
      %s263 = sphi 0, %s249
      %s267 = sphi 0, %s267
      %s269 = sphi 0, %s267
      %s270 = sphi 0, %s269
      %s284 = sphi 0, %s270
      %s288 = sphi 0, %s288
      %s290 = sphi 0, %s288
      %s291 = sphi 0, %s290
      %s305 = sphi 0, %s291
      %s309 = sphi 0, %s309
      %s311 = sphi 0, %s309
      %s312 = sphi 0, %s311
      %s326 = sphi 0, %s312
      %s330 = sphi 0, %s330
      %s332 = sphi 0, %s330
      %s333 = sphi 0, %s332
      %s347 = sphi 0, %s333
      %s355 = sphi 0, %s357
      %s358 = sphi 0, %s355
      %s359 = sphi 0, %s358
      %s375 = sphi 0, %s359
    $region4: #{tpu_custom_call.1} parent=1 // loop_header_branch
      %30 = sbr.rel (%p28) target = $region8
    $region5: #{tpu_custom_call.1} parent=1 // loop_body
      %s32 = ssub.s32 %s27, 1
      %s33 = ssub.s32 %s27, 2
      %s40 = sadd.s32 1, %s35
      %p41 = scmp.ge.s32.totalorder %s40, 1
      %s42 = scalar_select %p41, 0, %s40
      %s43 = sadd.s32 1, %s34
      %s44 = scalar_select %p41, %s43, %s34
      %p45 = scmp.ge.s32.totalorder %s44, 2
      %s46 = scalar_select %p45, 0, %s44
      %s47 = ssub.s32 %s34, %s46
      %p48 = scmp.eq.s32.totalorder %s47, 0
      %s50 = sadd.s32 %s49, 1
      %s51 = scalar_select %p48, %s49, %s50
      %p54 = pneg %p48
      %p55 = scmp.eq.s32.totalorder %s27, 1
      %p56 = por %p54, %p55
      %p57 = scmp.ne.s32.totalorder %s49, %s52
      %p58 = scmp.eq.s32.totalorder %s27, 0
      %p59 = por %p57, %p58
      %p60 = scmp.ne.s32.totalorder %s49, %s52
      %p61 = scmp.eq.s32.totalorder %s32, 1
      %p62 = por %p60, %p61
      %p63 = scmp.ne.s32.totalorder %s52, %s53
      %p64 = scmp.eq.s32.totalorder %s32, 0
      %p65 = por %p63, %p64
      %p66 = scmp.ne.s32.totalorder %s52, %s53
      %p67 = scmp.eq.s32.totalorder %s33, 1
      %p68 = por %p66, %p67
      %p70 = scmp.ne.s32.totalorder %s53, %s69
      %p71 = scmp.eq.s32.totalorder %s33, 0
      %p72 = por %p70, %p71
      %s73 = ssub.s32 %s34, %s46
      %p74 = scmp.eq.s32.totalorder %s73, 0
      %s76 = sadd.s32 %s75, 1
      %s77 = scalar_select %p74, %s75, %s76
      %p80 = pneg %p74
      %p81 = scmp.eq.s32.totalorder %s27, 1
      %p82 = por %p80, %p81
      %p83 = scmp.ne.s32.totalorder %s75, %s78
      %p84 = scmp.eq.s32.totalorder %s27, 0
      %p85 = por %p83, %p84
      %p86 = scmp.ne.s32.totalorder %s75, %s78
      %p87 = scmp.eq.s32.totalorder %s32, 1
      %p88 = por %p86, %p87
      %p89 = scmp.ne.s32.totalorder %s78, %s79
      %p90 = scmp.eq.s32.totalorder %s32, 0
      %p91 = por %p89, %p90
      %p92 = scmp.ne.s32.totalorder %s78, %s79
      %p93 = scmp.eq.s32.totalorder %s33, 1
      %p94 = por %p92, %p93
      %p96 = scmp.ne.s32.totalorder %s79, %s95
      %p97 = scmp.eq.s32.totalorder %s33, 0
      %p98 = por %p96, %p97
      %s100 = sadd.s32 %s99, 1
      %p103 = scmp.eq.s32.totalorder %s27, 1
      %p104 = scmp.ne.s32.totalorder %s99, %s101
      %p105 = scmp.eq.s32.totalorder %s27, 0
      %p106 = por %p104, %p105
      %p107 = scmp.ne.s32.totalorder %s99, %s101
      %p108 = scmp.eq.s32.totalorder %s32, 1
      %p109 = por %p107, %p108
      %p110 = scmp.ne.s32.totalorder %s101, %s102
      %p111 = scmp.eq.s32.totalorder %s32, 0
      %p112 = por %p110, %p111
      %p113 = scmp.ne.s32.totalorder %s101, %s102
      %p114 = scmp.eq.s32.totalorder %s33, 1
      %p115 = por %p113, %p114
      %p117 = scmp.ne.s32.totalorder %s102, %s116
      %p118 = scmp.eq.s32.totalorder %s33, 0
      %p119 = por %p117, %p118
      %s121 = sadd.s32 %s120, 1
      %p124 = scmp.eq.s32.totalorder %s27, 1
      %p125 = scmp.ne.s32.totalorder %s120, %s122
      %p126 = scmp.eq.s32.totalorder %s27, 0
      %p127 = por %p125, %p126
      %p128 = scmp.ne.s32.totalorder %s120, %s122
      %p129 = scmp.eq.s32.totalorder %s32, 1
      %p130 = por %p128, %p129
      %p131 = scmp.ne.s32.totalorder %s122, %s123
      %p132 = scmp.eq.s32.totalorder %s32, 0
      %p133 = por %p131, %p132
      %p134 = scmp.ne.s32.totalorder %s122, %s123
      %p135 = scmp.eq.s32.totalorder %s33, 1
      %p136 = por %p134, %p135
      %p138 = scmp.ne.s32.totalorder %s123, %s137
      %p139 = scmp.eq.s32.totalorder %s33, 0
      %p140 = por %p138, %p139
      %s142 = sadd.s32 %s141, 1
      %p145 = scmp.eq.s32.totalorder %s27, 1
      %p146 = scmp.ne.s32.totalorder %s141, %s143
      %p147 = scmp.eq.s32.totalorder %s27, 0
      %p148 = por %p146, %p147
      %p149 = scmp.ne.s32.totalorder %s141, %s143
      %p150 = scmp.eq.s32.totalorder %s32, 1
      %p151 = por %p149, %p150
      %p152 = scmp.ne.s32.totalorder %s143, %s144
      %p153 = scmp.eq.s32.totalorder %s32, 0
      %p154 = por %p152, %p153
      %p155 = scmp.ne.s32.totalorder %s143, %s144
      %p156 = scmp.eq.s32.totalorder %s33, 1
      %p157 = por %p155, %p156
      %p159 = scmp.ne.s32.totalorder %s144, %s158
      %p160 = scmp.eq.s32.totalorder %s33, 0
      %p161 = por %p159, %p160
      %s163 = sadd.s32 %s162, 1
      %p166 = scmp.eq.s32.totalorder %s27, 1
      %p167 = scmp.ne.s32.totalorder %s162, %s164
      %p168 = scmp.eq.s32.totalorder %s27, 0
      %p169 = por %p167, %p168
      %p170 = scmp.ne.s32.totalorder %s162, %s164
      %p171 = scmp.eq.s32.totalorder %s32, 1
      %p172 = por %p170, %p171
      %p173 = scmp.ne.s32.totalorder %s164, %s165
      %p174 = scmp.eq.s32.totalorder %s32, 0
      %p175 = por %p173, %p174
      %p176 = scmp.ne.s32.totalorder %s164, %s165
      %p177 = scmp.eq.s32.totalorder %s33, 1
      %p178 = por %p176, %p177
      %p180 = scmp.ne.s32.totalorder %s165, %s179
      %p181 = scmp.eq.s32.totalorder %s33, 0
      %p182 = por %p180, %p181
      %s184 = sadd.s32 %s183, 1
      %p187 = scmp.eq.s32.totalorder %s27, 1
      %p188 = scmp.ne.s32.totalorder %s183, %s185
      %p189 = scmp.eq.s32.totalorder %s27, 0
      %p190 = por %p188, %p189
      %p191 = scmp.ne.s32.totalorder %s183, %s185
      %p192 = scmp.eq.s32.totalorder %s32, 1
      %p193 = por %p191, %p192
      %p194 = scmp.ne.s32.totalorder %s185, %s186
      %p195 = scmp.eq.s32.totalorder %s32, 0
      %p196 = por %p194, %p195
      %p197 = scmp.ne.s32.totalorder %s185, %s186
      %p198 = scmp.eq.s32.totalorder %s33, 1
      %p199 = por %p197, %p198
      %p201 = scmp.ne.s32.totalorder %s186, %s200
      %p202 = scmp.eq.s32.totalorder %s33, 0
      %p203 = por %p201, %p202
      %s205 = sadd.s32 %s204, 1
      %p208 = scmp.eq.s32.totalorder %s27, 1
      %p209 = scmp.ne.s32.totalorder %s204, %s206
      %p210 = scmp.eq.s32.totalorder %s27, 0
      %p211 = por %p209, %p210
      %p212 = scmp.ne.s32.totalorder %s204, %s206
      %p213 = scmp.eq.s32.totalorder %s32, 1
      %p214 = por %p212, %p213
      %p215 = scmp.ne.s32.totalorder %s206, %s207
      %p216 = scmp.eq.s32.totalorder %s32, 0
      %p217 = por %p215, %p216
      %p218 = scmp.ne.s32.totalorder %s206, %s207
      %p219 = scmp.eq.s32.totalorder %s33, 1
      %p220 = por %p218, %p219
      %p222 = scmp.ne.s32.totalorder %s207, %s221
      %p223 = scmp.eq.s32.totalorder %s33, 0
      %p224 = por %p222, %p223
      %s226 = sadd.s32 %s225, 1
      %p229 = scmp.eq.s32.totalorder %s27, 1
      %p230 = scmp.ne.s32.totalorder %s225, %s227
      %p231 = scmp.eq.s32.totalorder %s27, 0
      %p232 = por %p230, %p231
      %p233 = scmp.ne.s32.totalorder %s225, %s227
      %p234 = scmp.eq.s32.totalorder %s32, 1
      %p235 = por %p233, %p234
      %p236 = scmp.ne.s32.totalorder %s227, %s228
      %p237 = scmp.eq.s32.totalorder %s32, 0
      %p238 = por %p236, %p237
      %p239 = scmp.ne.s32.totalorder %s227, %s228
      %p240 = scmp.eq.s32.totalorder %s33, 1
      %p241 = por %p239, %p240
      %p243 = scmp.ne.s32.totalorder %s228, %s242
      %p244 = scmp.eq.s32.totalorder %s33, 0
      %p245 = por %p243, %p244
      %s247 = sadd.s32 %s246, 1
      %p250 = scmp.eq.s32.totalorder %s27, 1
      %p251 = scmp.ne.s32.totalorder %s246, %s248
      %p252 = scmp.eq.s32.totalorder %s27, 0
      %p253 = por %p251, %p252
      %p254 = scmp.ne.s32.totalorder %s246, %s248
      %p255 = scmp.eq.s32.totalorder %s32, 1
      %p256 = por %p254, %p255
      %p257 = scmp.ne.s32.totalorder %s248, %s249
      %p258 = scmp.eq.s32.totalorder %s32, 0
      %p259 = por %p257, %p258
      %p260 = scmp.ne.s32.totalorder %s248, %s249
      %p261 = scmp.eq.s32.totalorder %s33, 1
      %p262 = por %p260, %p261
      %p264 = scmp.ne.s32.totalorder %s249, %s263
      %p265 = scmp.eq.s32.totalorder %s33, 0
      %p266 = por %p264, %p265
      %s268 = sadd.s32 %s267, 1
      %p271 = scmp.eq.s32.totalorder %s27, 1
      %p272 = scmp.ne.s32.totalorder %s267, %s269
      %p273 = scmp.eq.s32.totalorder %s27, 0
      %p274 = por %p272, %p273
      %p275 = scmp.ne.s32.totalorder %s267, %s269
      %p276 = scmp.eq.s32.totalorder %s32, 1
      %p277 = por %p275, %p276
      %p278 = scmp.ne.s32.totalorder %s269, %s270
      %p279 = scmp.eq.s32.totalorder %s32, 0
      %p280 = por %p278, %p279
      %p281 = scmp.ne.s32.totalorder %s269, %s270
      %p282 = scmp.eq.s32.totalorder %s33, 1
      %p283 = por %p281, %p282
      %p285 = scmp.ne.s32.totalorder %s270, %s284
      %p286 = scmp.eq.s32.totalorder %s33, 0
      %p287 = por %p285, %p286
      %s289 = sadd.s32 %s288, 1
      %p292 = scmp.eq.s32.totalorder %s27, 1
      %p293 = scmp.ne.s32.totalorder %s288, %s290
      %p294 = scmp.eq.s32.totalorder %s27, 0
      %p295 = por %p293, %p294
      %p296 = scmp.ne.s32.totalorder %s288, %s290
      %p297 = scmp.eq.s32.totalorder %s32, 1
      %p298 = por %p296, %p297
      %p299 = scmp.ne.s32.totalorder %s290, %s291
      %p300 = scmp.eq.s32.totalorder %s32, 0
      %p301 = por %p299, %p300
      %p302 = scmp.ne.s32.totalorder %s290, %s291
      %p303 = scmp.eq.s32.totalorder %s33, 1
      %p304 = por %p302, %p303
      %p306 = scmp.ne.s32.totalorder %s291, %s305
      %p307 = scmp.eq.s32.totalorder %s33, 0
      %p308 = por %p306, %p307
      %s310 = sadd.s32 %s309, 1
      %p313 = scmp.eq.s32.totalorder %s27, 1
      %p314 = scmp.ne.s32.totalorder %s309, %s311
      %p315 = scmp.eq.s32.totalorder %s27, 0
      %p316 = por %p314, %p315
      %p317 = scmp.ne.s32.totalorder %s309, %s311
      %p318 = scmp.eq.s32.totalorder %s32, 1
      %p319 = por %p317, %p318
      %p320 = scmp.ne.s32.totalorder %s311, %s312
      %p321 = scmp.eq.s32.totalorder %s32, 0
      %p322 = por %p320, %p321
      %p323 = scmp.ne.s32.totalorder %s311, %s312
      %p324 = scmp.eq.s32.totalorder %s33, 1
      %p325 = por %p323, %p324
      %p327 = scmp.ne.s32.totalorder %s312, %s326
      %p328 = scmp.eq.s32.totalorder %s33, 0
      %p329 = por %p327, %p328
      %s331 = sadd.s32 %s330, 1
      %p334 = scmp.eq.s32.totalorder %s27, 1
      %p335 = scmp.ne.s32.totalorder %s330, %s332
      %p336 = scmp.eq.s32.totalorder %s27, 0
      %p337 = por %p335, %p336
      %p338 = scmp.ne.s32.totalorder %s330, %s332
      %p339 = scmp.eq.s32.totalorder %s32, 1
      %p340 = por %p338, %p339
      %p341 = scmp.ne.s32.totalorder %s332, %s333
      %p342 = scmp.eq.s32.totalorder %s32, 0
      %p343 = por %p341, %p342
      %p344 = scmp.ne.s32.totalorder %s332, %s333
      %p345 = scmp.eq.s32.totalorder %s33, 1
      %p346 = por %p344, %p345
      %p348 = scmp.ne.s32.totalorder %s333, %s347
      %p349 = scmp.eq.s32.totalorder %s33, 0
      %p350 = por %p348, %p349
      %s351 = ssub.s32 %s34, %s46
      %s352 = ssub.s32 %s35, %s42
      %s353 = sor.u32 %s351, %s352
      %p354 = scmp.eq.s32.totalorder %s353, 0
      %s356 = sadd.s32 %s355, 1
      %s357 = scalar_select %p354, %s355, %s356
      %p360 = pneg %p354
      %p361 = scmp.eq.s32.totalorder %s27, 1
      %p362 = por %p360, %p361
      %p363 = scmp.ne.s32.totalorder %s355, %s358
      %p364 = scmp.eq.s32.totalorder %s27, 0
      %p365 = por %p363, %p364
      %p366 = scmp.ne.s32.totalorder %s355, %s358
      %p367 = scmp.eq.s32.totalorder %s32, 1
      %p368 = por %p366, %p367
      %p369 = scmp.ne.s32.totalorder %s358, %s359
      %p370 = scmp.eq.s32.totalorder %s32, 0
      %p371 = por %p369, %p370
      %p372 = scmp.ne.s32.totalorder %s358, %s359
      %p373 = scmp.eq.s32.totalorder %s33, 1
      %p374 = por %p372, %p373
      %p376 = scmp.ne.s32.totalorder %s359, %s375
      %p377 = scmp.eq.s32.totalorder %s33, 0
      %p378 = por %p376, %p377
      %p379 = scmp.le.s32.totalorder 1, %s27
      %p380 = scmp.lt.s32.totalorder %s27, 3
      %p381 = pnand %p379, %p380
      %p382 = pneg %p381
      // Predicated region
      $region9: #{tpu_custom_call.1} parent=5 // pred_check
        _
      $region10: #{tpu_custom_call.1} parent=5 // pred_check_branch
        %384 = sbr.rel (%p381) target = $region12
      $region11: #{tpu_custom_call.1} parent=5 // pred_region
        %s385 = ssub.s32 %s27, 1
        // Predicated region
        $region13: #{tpu_custom_call.1} parent=11 // pred_check
          %p386 = pneg %p112
        $region14: #{tpu_custom_call.1} parent=11 // pred_check_branch
          %388 = sbr.rel (%p386) target = $region16
        $region15: #{tpu_custom_call.1} parent=11 // pred_region
          _
        $region16: #{tpu_custom_call.1} parent=11 // pred_fallthru
          _
        // Predicated region
        $region17: #{tpu_custom_call.1} parent=11 // pred_check
          %p389 = pneg %p133
        $region18: #{tpu_custom_call.1} parent=11 // pred_check_branch
          %391 = sbr.rel (%p389) target = $region20
        $region19: #{tpu_custom_call.1} parent=11 // pred_region
          _
        $region20: #{tpu_custom_call.1} parent=11 // pred_fallthru
          _
        // Predicated region
        $region21: #{tpu_custom_call.1} parent=11 // pred_check
          %p392 = pneg %p154
        $region22: #{tpu_custom_call.1} parent=11 // pred_check_branch
          %394 = sbr.rel (%p392) target = $region24
        $region23: #{tpu_custom_call.1} parent=11 // pred_region
          _
        $region24: #{tpu_custom_call.1} parent=11 // pred_fallthru
          _
        // Predicated region
        $region25: #{tpu_custom_call.1} parent=11 // pred_check
          %p395 = pneg %p175
        $region26: #{tpu_custom_call.1} parent=11 // pred_check_branch
          %397 = sbr.rel (%p395) target = $region28
        $region27: #{tpu_custom_call.1} parent=11 // pred_region
          _
        $region28: #{tpu_custom_call.1} parent=11 // pred_fallthru
          _
        // Predicated region
        $region29: #{tpu_custom_call.1} parent=11 // pred_check
          %p398 = pneg %p196
        $region30: #{tpu_custom_call.1} parent=11 // pred_check_branch
          %400 = sbr.rel (%p398) target = $region32
        $region31: #{tpu_custom_call.1} parent=11 // pred_region
          _
        $region32: #{tpu_custom_call.1} parent=11 // pred_fallthru
          _
        // Predicated region
        $region33: #{tpu_custom_call.1} parent=11 // pred_check
          %p401 = pneg %p217
        $region34: #{tpu_custom_call.1} parent=11 // pred_check_branch
          %403 = sbr.rel (%p401) target = $region36
        $region35: #{tpu_custom_call.1} parent=11 // pred_region
          _
        $region36: #{tpu_custom_call.1} parent=11 // pred_fallthru
          _
        // Predicated region
        $region37: #{tpu_custom_call.1} parent=11 // pred_check
          %p404 = pneg %p238
        $region38: #{tpu_custom_call.1} parent=11 // pred_check_branch
          %406 = sbr.rel (%p404) target = $region40
        $region39: #{tpu_custom_call.1} parent=11 // pred_region
          _
        $region40: #{tpu_custom_call.1} parent=11 // pred_fallthru
          _
        // Predicated region
        $region41: #{tpu_custom_call.1} parent=11 // pred_check
          %p407 = pneg %p259
        $region42: #{tpu_custom_call.1} parent=11 // pred_check_branch
          %409 = sbr.rel (%p407) target = $region44
        $region43: #{tpu_custom_call.1} parent=11 // pred_region
          _
        $region44: #{tpu_custom_call.1} parent=11 // pred_fallthru
          _
        // Predicated region
        $region45: #{tpu_custom_call.1} parent=11 // pred_check
          %p410 = pneg %p280
        $region46: #{tpu_custom_call.1} parent=11 // pred_check_branch
          %412 = sbr.rel (%p410) target = $region48
        $region47: #{tpu_custom_call.1} parent=11 // pred_region
          %414 = vsyncadd [#allocation6], 0
          %s415 = sshll.u32 %s10, 4
          %s416 = int_to_ptr.hbm [resolvable:$true] %s415
          %s417 = sshll.u32 [#allocation5], 4
          %s418 = int_to_ptr.vmem [resolvable:$true] %s417
          %423 = dma.hbm_to_vmem [thread:$0]  %s416, 256, %s418, [#allocation6], 64, 64, 4
        $region48: #{tpu_custom_call.1} parent=11 // pred_fallthru
          _
        // Predicated region
        $region49: #{tpu_custom_call.1} parent=11 // pred_check
          %p424 = pneg %p301
        $region50: #{tpu_custom_call.1} parent=11 // pred_check_branch
          %426 = sbr.rel (%p424) target = $region52
        $region51: #{tpu_custom_call.1} parent=11 // pred_region
          _
        $region52: #{tpu_custom_call.1} parent=11 // pred_fallthru
          _
        // Predicated region
        $region53: #{tpu_custom_call.1} parent=11 // pred_check
          %p427 = pneg %p322
        $region54: #{tpu_custom_call.1} parent=11 // pred_check_branch
          %429 = sbr.rel (%p427) target = $region56
        $region55: #{tpu_custom_call.1} parent=11 // pred_region
          _
        $region56: #{tpu_custom_call.1} parent=11 // pred_fallthru
          _
        // Predicated region
        $region57: #{tpu_custom_call.1} parent=11 // pred_check
          %p430 = pneg %p343
        $region58: #{tpu_custom_call.1} parent=11 // pred_check_branch
          %432 = sbr.rel (%p430) target = $region60
        $region59: #{tpu_custom_call.1} parent=11 // pred_region
          _
        $region60: #{tpu_custom_call.1} parent=11 // pred_fallthru
          _
      $region12: #{tpu_custom_call.1} parent=5 // pred_fallthru
        _
      %p433 = scmp.lt.s32.totalorder %s27, 2
      // Predicated region
      $region61: #{tpu_custom_call.1} parent=5 // pred_check
        %p434 = pneg %p433
      $region62: #{tpu_custom_call.1} parent=5 // pred_check_branch
        %436 = sbr.rel (%p434) target = $region64
      $region63: #{tpu_custom_call.1} parent=5 // pred_region
        // Predicated region
        $region65: #{tpu_custom_call.1} parent=63 // pred_check
          %p437 = pneg %p59
        $region66: #{tpu_custom_call.1} parent=63 // pred_check_branch
          %439 = sbr.rel (%p437) target = $region68
        $region67: #{tpu_custom_call.1} parent=63 // pred_region
          %p440 = scmp.lt.s32.totalorder %s34, 1
          %s441 = scalar_select %p440, %s34, 1
          %s442 = smul.addr %s441, 8
          %s443 = scalar_lea.vmem %s0, %s442
        $region68: #{tpu_custom_call.1} parent=63 // pred_fallthru
          _
        // Predicated region
        $region69: #{tpu_custom_call.1} parent=63 // pred_check
          %p444 = pneg %p85
        $region70: #{tpu_custom_call.1} parent=63 // pred_check_branch
          %446 = sbr.rel (%p444) target = $region72
        $region71: #{tpu_custom_call.1} parent=63 // pred_region
          %s447 = sand.u32 %s75, 1
          %s448 = scalar_lea.sflag [#allocation3], %s447
          %s449 = sand.u32 %s75, 1
          %s450 = scalar_lea.vmem [#allocation2], %s449
          %452 = vsyncadd %s448, 0
          %s453 = scalar_lea.hbm %s1, %s34
          %s455 = sshll.u32 %s453, 4
          %s456 = int_to_ptr.hbm [resolvable:$true] %s455
          %s457 = sshll.u32 %s450, 4
          %s458 = int_to_ptr.vmem [resolvable:$true] %s457
          %460 = dma.hbm_to_vmem [thread:$0]  %s456, 16, %s458, %s448
        $region72: #{tpu_custom_call.1} parent=63 // pred_fallthru
          _
      $region64: #{tpu_custom_call.1} parent=5 // pred_fallthru
        _
      %p461 = scmp.le.s32.totalorder 1, %s27
      %p462 = scmp.lt.s32.totalorder %s27, 3
      %p463 = pnand %p461, %p462
      %p464 = pneg %p463
      // Predicated region
      $region73: #{tpu_custom_call.1} parent=5 // pred_check
        _
      $region74: #{tpu_custom_call.1} parent=5 // pred_check_branch
        %466 = sbr.rel (%p463) target = $region76
      $region75: #{tpu_custom_call.1} parent=5 // pred_region
        %s467 = ssub.s32 %s27, 1
        %s468 = sand.u32 %s78, 1
        %s469 = scalar_lea.sflag [#allocation3], %s468
        %s470 = sand.u32 %s78, 1
        %s471 = scalar_lea.vmem [#allocation2], %s470
        // Predicated region
        $region77: #{tpu_custom_call.1} parent=75 // pred_check
          %p472 = pneg %p91
        $region78: #{tpu_custom_call.1} parent=75 // pred_check_branch
          %474 = sbr.rel (%p472) target = $region80
        $region79: #{tpu_custom_call.1} parent=75 // pred_region
          %476 = dma.done %s469, 16
        $region80: #{tpu_custom_call.1} parent=75 // pred_fallthru
          _
        // Predicated region
        $region81: #{tpu_custom_call.1} parent=75 // pred_check
          %p477 = pneg %p280
        $region82: #{tpu_custom_call.1} parent=75 // pred_check_branch
          %479 = sbr.rel (%p477) target = $region84
        $region83: #{tpu_custom_call.1} parent=75 // pred_region
          %481 = dma.done [#allocation6], 256
        $region84: #{tpu_custom_call.1} parent=75 // pred_fallthru
          _
        %p482 = scmp.lt.s32.totalorder %s36, 1
        %s483 = scalar_select %p482, %s36, 1
        %s484 = smul.addr %s483, 8
        %s485 = scalar_lea.vmem %s0, %s484
        %p486 = pneg %p65
        %p487 = pneg %p62
        %s488 = sand.u32 %s78, 1
        %s489 = scalar_lea.sflag [#allocation3], %s488
        %s490 = sand.u32 %s78, 1
        %s491 = scalar_lea.vmem [#allocation2], %s490
        %p492 = pneg %p91
        %p493 = pneg %p88
        %p494 = pneg %p112
        %p495 = pneg %p109
        %p496 = pneg %p133
        %p497 = pneg %p130
        %p498 = pneg %p154
        %p499 = pneg %p151
        %p500 = pneg %p175
        %p501 = pneg %p172
        %p502 = pneg %p196
        %p503 = pneg %p193
        %p504 = pneg %p217
        %p505 = pneg %p214
        %p506 = pneg %p238
        %p507 = pneg %p235
        %p508 = pneg %p259
        %p509 = pneg %p256
        %p510 = pneg %p280
        %p511 = pneg %p277
        %p512 = pneg %p301
        %p513 = pneg %p298
        %p514 = pneg %p322
        %p515 = pneg %p319
        %p516 = pneg %p343
        %p517 = pneg %p340
        %p518 = pneg %p371
        %p519 = pneg %p368
        %s520 = sand.u32 %s358, 1
        %s521 = scalar_lea.sflag [#allocation4], %s520
        %s522 = sand.u32 %s358, 1
        %s523 = smul.addr %s522, 8
        %s524 = scalar_lea.vmem [#allocation7], %s523
        %p525 = scmp.lt.s32.totalorder %s36, 1
        %s526 = scalar_select %p525, %s36, 1
        %s527 = smul.addr %s526, 8
        %s528 = scalar_lea.vmem %s0, %s527
        %v530 = vld [vmem:[%s528] sm:$0xff]
        %s531 = smul.u32 %s37, 8
        %s532 = scalar_lea.vmem %s528, %s531
        %v533 = vld [vmem:[%s532] sm:$0xff]
        %v534 = vld [vmem:[%s2] sm:$0x1]
        %v535 = vld [vmem:[%s3] sm:$0x1]
        %vm536 = vcmask 261120
        %v537 = vsel %vm536, %v530, 0.0
        %538 = vadd.xlane.f32.xlu0 %v537
        %v539 = vpop.xlane.xlu0 %538
        %v540 = vrcp.pop 32.0
        %v541 = vmul.f32 32.0, %v540
        %v542 = vsub.f32 1.0, %v541
        %v543 = vmul.f32 %v540, %v542
        %v544 = vadd.f32 %v540, %v543
        %vm545 = vweird.f32 %v540
        %v546 = vsel %vm545, %v540, %v544
        %v547 = vmul.f32 %v539, %v546
        %v548 = vsub.f32 %v530, %v547
        %v549 = vmul.f32 %v548, %v548
        %v550 = vsel %vm536, %v549, 0.0
        %551 = vadd.xlane.f32.xlu0 %v550
        %v552 = vpop.xlane.xlu0 %551
        %v553 = vmul.f32 %v552, %v546
        %v554 = vadd.f32 %v553, 1e-05
        %v555 = vrsqrt.pop %v554
        %v556 = vmul.f32 %v555, %v554
        %v557 = vmul.f32 %v556, %v555
        %v558 = vmul.f32 0.5, %v557
        %v559 = vsub.f32 1.5, %v558
        %v560 = vmul.f32 %v555, %v559
        %vm561 = vweird.f32 %v554
        %vm562 = vweird.f32 %v555
        %vm563 = vmor %vm561, %vm562
        %v564 = vsel %vm563, %v555, %v560
        %v565 = vmul.f32 %v548, %v564
        %v567 = vperm.slane %v534, 0
        %v569 = vmul.f32 %v565, %v567
        %v571 = vperm.slane %v535, 0
        %v573 = vadd.f32 %v569, %v571
        %v574 = vsel %vm536, %v533, 0.0
        %575 = vadd.xlane.f32.xlu0 %v574
        %v576 = vpop.xlane.xlu0 %575
        %v577 = vmul.f32 %v576, %v546
        %v578 = vsub.f32 %v533, %v577
        %v579 = vmul.f32 %v578, %v578
        %v580 = vsel %vm536, %v579, 0.0
        %581 = vadd.xlane.f32.xlu0 %v580
        %v582 = vpop.xlane.xlu0 %581
        %v583 = vmul.f32 %v582, %v546
        %v584 = vadd.f32 %v583, 1e-05
        %v585 = vrsqrt.pop %v584
        %v586 = vmul.f32 %v585, %v584
        %v587 = vmul.f32 %v586, %v585
        %v588 = vmul.f32 0.5, %v587
        %v589 = vsub.f32 1.5, %v588
        %v590 = vmul.f32 %v585, %v589
        %vm591 = vweird.f32 %v584
        %vm592 = vweird.f32 %v585
        %vm593 = vmor %vm591, %vm592
        %v594 = vsel %vm593, %v585, %v590
        %v595 = vmul.f32 %v578, %v594
        %v596 = vmul.f32 %v595, %v567
        %v597 = vadd.f32 %v596, %v571
        %v598 = vld [vmem:[%s4] sm:$0xf]
        %v599 = vld [vmem:[%s4 + $0x4] sm:$0xf]
        %v600 = vld [vmem:[%s4 + $0x8] sm:$0xf]
        %v601 = vld [vmem:[%s4 + $0xc] sm:$0xf]
        %v602 = vld [vmem:[%s5] sm:$0x1]
        %v603 = vpack.c.bf16 %v597, %v597
        %v605 = vperm.slane %v602, 0
        %v611 = vunpack.c.l.b16 %v598
        %v612 = vunpack.c.l.b16 %v599
        %v613 = vunpack.c.l.b16 %v600
        %v614 = vunpack.c.l.b16 %v601
        %v615 = vpack.c.b16 %v612, %v611
        %v616 = vpack.c.b16 %v614, %v613
        %v620 = vsel %vm536, %v603, 0
        %622 = vmatpush.bf16.msra.mxu0 0
        %623 = vmatpush.bf16.msra.mxu0 0
        %624 = vmatpush.bf16.msra.mxu0 0
        %625 = vmatpush.bf16.msra.mxu0 0
        %626 = vmatpush.bf16.msra.mxu0 0
        %627 = vmatpush.bf16.msra.mxu0 0
        %628 = vmatpush.bf16.msra.mxu0 %v616
        %629 = vmatpush.bf16.msra.mxu0 %v615
        %630 = vmatmul.bf16.gmra.mxu0 %v620
        %v631 = vpop.f32.mrf.mxu0
        %v632 = vadd.f32 %v605, %v631
        %v633 = vpop.f32.mrf.mxu0
        %634 = vdwg.mxu0
        %v635 = vpack.c.bf16 %v573, %v573
        %636 = vrot.lane.b32.xlu0 %v615, 96
        %v637 = vpop.permute.xlu0 %636
        %638 = vrot.lane.b32.xlu0 %v616, 96
        %v639 = vpop.permute.xlu0 %638
        %642 = vrot.lane.b32.xlu0 %v605, 96
        %v643 = vpop.permute.xlu0 %642
        %v646 = vsel %vm536, %v635, 0
        %648 = vmatpush.bf16.msra.mxu0 0
        %649 = vmatpush.bf16.msra.mxu0 0
        %650 = vmatpush.bf16.msra.mxu0 0
        %651 = vmatpush.bf16.msra.mxu0 0
        %652 = vmatpush.bf16.msra.mxu0 0
        %653 = vmatpush.bf16.msra.mxu0 0
        %654 = vmatpush.bf16.msra.mxu0 %v639
        %655 = vmatpush.bf16.msra.mxu0 %v637
        %656 = vmatmul.bf16.gmra.mxu0 %v646
        %v657 = vpop.f32.mrf.mxu0
        %v658 = vadd.f32 %v643, %v657
        %v659 = vpop.f32.mrf.mxu0
        %660 = vdwg.mxu0
        %662 = vrot.lane.b32.xlu0 %v632, 120
        %v663 = vpop.permute.xlu0 %662
        %665 = vrot.lane.b32.xlu0 %v632, 112
        %v666 = vpop.permute.xlu0 %665
        %668 = vrot.lane.b32.xlu0 %v632, 104
        %v669 = vpop.permute.xlu0 %668
        %v671 = vrot.slane %v666, 4
        %vm672 = vcmask 1047556
        %v673 = vsel %vm672, %v671, %v632
        %v674 = vrot.slane %v632, 4
        %v675 = vsel %vm672, %v666, %v674
        %v677 = vunpack.c.l.s4 1983009808
        %v678 = vunpack.c.0.s8 %v677
        %v679 = vperm.slane %v673, %v678
        %v681 = vunpack.c.l.s4 1983009808
        %v682 = vunpack.c.0.s8 %v681
        %v683 = vperm.slane %v675, %v682
        %v684 = vrot.slane %v669, 4
        %v685 = vsel %vm672, %v684, %v663
        %v686 = vrot.slane %v663, 4
        %v687 = vsel %vm672, %v669, %v686
        %v689 = vunpack.c.l.s4 1983009808
        %v690 = vunpack.c.0.s8 %v689
        %v691 = vperm.slane %v685, %v690
        %v693 = vunpack.c.l.s4 1983009808
        %v694 = vunpack.c.0.s8 %v693
        %v695 = vperm.slane %v687, %v694
        %v696 = vrot.slane %v691, 4
        %v697 = vsel %vm672, %v696, %v679
        %v698 = vrot.slane %v679, 4
        %v699 = vsel %vm672, %v691, %v698
        %v701 = vunpack.c.l.s4 1934713408
        %v702 = vunpack.c.0.s8 %v701
        %v703 = vperm.slane %v697, %v702
        %v705 = vunpack.c.l.s4 1934713408
        %v706 = vunpack.c.0.s8 %v705
        %v707 = vperm.slane %v699, %v706
        %v708 = vrot.slane %v695, 4
        %v709 = vsel %vm672, %v708, %v683
        %v710 = vrot.slane %v683, 4
        %v711 = vsel %vm672, %v695, %v710
        %v713 = vunpack.c.l.s4 1934713408
        %v714 = vunpack.c.0.s8 %v713
        %v715 = vperm.slane %v709, %v714
        %v717 = vunpack.c.l.s4 1934713408
        %v718 = vunpack.c.0.s8 %v717
        %v719 = vperm.slane %v711, %v718
        %v720 = vrot.slane %v703, 4
        %v721 = vsel %vm672, 0.0, %v720
        %v722 = vrot.slane %v707, 4
        %v723 = vsel %vm672, 0.0, %v722
        %v724 = vrot.slane %v715, 4
        %v725 = vsel %vm672, 0.0, %v724
        %v726 = vrot.slane %v719, 4
        %v727 = vsel %vm672, 0.0, %v726
        %v728 = vsel %vm672, %v722, %v703
        %v730 = vunpack.c.l.s4 1983009808
        %v731 = vunpack.c.0.s8 %v730
        %v732 = vperm.slane %v728, %v731
        %v733 = vrot.slane %v723, 4
        %v734 = vsel %vm672, %v733, %v721
        %v736 = vunpack.c.l.s4 1983009808
        %v737 = vunpack.c.0.s8 %v736
        %v738 = vperm.slane %v734, %v737
        %v739 = vsel %vm672, %v726, %v715
        %v741 = vunpack.c.l.s4 1983009808
        %v742 = vunpack.c.0.s8 %v741
        %v743 = vperm.slane %v739, %v742
        %v744 = vrot.slane %v727, 4
        %v745 = vsel %vm672, %v744, %v725
        %v747 = vunpack.c.l.s4 1983009808
        %v748 = vunpack.c.0.s8 %v747
        %v749 = vperm.slane %v745, %v748
        %v750 = vrot.slane %v738, 4
        %v751 = vsel %vm672, %v750, %v732
        %v752 = vrot.slane %v732, 4
        %v753 = vsel %vm672, %v738, %v752
        %v755 = vunpack.c.l.s4 1934713408
        %v756 = vunpack.c.0.s8 %v755
        %v757 = vperm.slane %v751, %v756
        %v759 = vunpack.c.l.s4 1934713408
        %v760 = vunpack.c.0.s8 %v759
        %v761 = vperm.slane %v753, %v760
        %v762 = vrot.slane %v749, 4
        %v763 = vsel %vm672, %v762, %v743
        %v764 = vrot.slane %v743, 4
        %v765 = vsel %vm672, %v749, %v764
        %v767 = vunpack.c.l.s4 1934713408
        %v768 = vunpack.c.0.s8 %v767
        %v769 = vperm.slane %v763, %v768
        %v771 = vunpack.c.l.s4 1934713408
        %v772 = vunpack.c.0.s8 %v771
        %v773 = vperm.slane %v765, %v772
        %v774 = vrot.slane %v769, 4
        %v775 = vsel %vm672, %v774, %v757
        %v776 = vrot.slane %v757, 4
        %v777 = vsel %vm672, %v769, %v776
        %v778 = vrot.slane %v773, 4
        %v779 = vsel %vm672, %v778, %v761
        %v780 = vrot.slane %v761, 4
        %v781 = vsel %vm672, %v773, %v780
        %783 = vrot.lane.b32.xlu0 %v658, 120
        %v784 = vpop.permute.xlu0 %783
        %786 = vrot.lane.b32.xlu0 %v658, 112
        %v787 = vpop.permute.xlu0 %786
        %789 = vrot.lane.b32.xlu0 %v658, 104
        %v790 = vpop.permute.xlu0 %789
        %v792 = vrot.slane %v787, 4
        %v793 = vsel %vm672, %v792, %v658
        %v794 = vrot.slane %v658, 4
        %v795 = vsel %vm672, %v787, %v794
        %v797 = vunpack.c.l.s4 1983009808
        %v798 = vunpack.c.0.s8 %v797
        %v799 = vperm.slane %v793, %v798
        %v801 = vunpack.c.l.s4 1983009808
        %v802 = vunpack.c.0.s8 %v801
        %v803 = vperm.slane %v795, %v802
        %v804 = vrot.slane %v790, 4
        %v805 = vsel %vm672, %v804, %v784
        %v806 = vrot.slane %v784, 4
        %v807 = vsel %vm672, %v790, %v806
        %v809 = vunpack.c.l.s4 1983009808
        %v810 = vunpack.c.0.s8 %v809
        %v811 = vperm.slane %v805, %v810
        %v813 = vunpack.c.l.s4 1983009808
        %v814 = vunpack.c.0.s8 %v813
        %v815 = vperm.slane %v807, %v814
        %v816 = vrot.slane %v811, 4
        %v817 = vsel %vm672, %v816, %v799
        %v818 = vrot.slane %v799, 4
        %v819 = vsel %vm672, %v811, %v818
        %v821 = vunpack.c.l.s4 1934713408
        %v822 = vunpack.c.0.s8 %v821
        %v823 = vperm.slane %v817, %v822
        %v825 = vunpack.c.l.s4 1934713408
        %v826 = vunpack.c.0.s8 %v825
        %v827 = vperm.slane %v819, %v826
        %v828 = vrot.slane %v815, 4
        %v829 = vsel %vm672, %v828, %v803
        %v830 = vrot.slane %v803, 4
        %v831 = vsel %vm672, %v815, %v830
        %v833 = vunpack.c.l.s4 1934713408
        %v834 = vunpack.c.0.s8 %v833
        %v835 = vperm.slane %v829, %v834
        %v837 = vunpack.c.l.s4 1934713408
        %v838 = vunpack.c.0.s8 %v837
        %v839 = vperm.slane %v831, %v838
        %v840 = vrot.slane %v823, 4
        %v841 = vsel %vm672, 0.0, %v840
        %v842 = vrot.slane %v827, 4
        %v843 = vsel %vm672, 0.0, %v842
        %v844 = vrot.slane %v835, 4
        %v845 = vsel %vm672, 0.0, %v844
        %v846 = vrot.slane %v839, 4
        %v847 = vsel %vm672, 0.0, %v846
        %v848 = vsel %vm672, %v842, %v823
        %v850 = vunpack.c.l.s4 1983009808
        %v851 = vunpack.c.0.s8 %v850
        %v852 = vperm.slane %v848, %v851
        %v853 = vrot.slane %v843, 4
        %v854 = vsel %vm672, %v853, %v841
        %v856 = vunpack.c.l.s4 1983009808
        %v857 = vunpack.c.0.s8 %v856
        %v858 = vperm.slane %v854, %v857
        %v859 = vsel %vm672, %v846, %v835
        %v861 = vunpack.c.l.s4 1983009808
        %v862 = vunpack.c.0.s8 %v861
        %v863 = vperm.slane %v859, %v862
        %v864 = vrot.slane %v847, 4
        %v865 = vsel %vm672, %v864, %v845
        %v867 = vunpack.c.l.s4 1983009808
        %v868 = vunpack.c.0.s8 %v867
        %v869 = vperm.slane %v865, %v868
        %v870 = vrot.slane %v858, 4
        %v871 = vsel %vm672, %v870, %v852
        %v872 = vrot.slane %v852, 4
        %v873 = vsel %vm672, %v858, %v872
        %v875 = vunpack.c.l.s4 1934713408
        %v876 = vunpack.c.0.s8 %v875
        %v877 = vperm.slane %v871, %v876
        %v879 = vunpack.c.l.s4 1934713408
        %v880 = vunpack.c.0.s8 %v879
        %v881 = vperm.slane %v873, %v880
        %v882 = vrot.slane %v869, 4
        %v883 = vsel %vm672, %v882, %v863
        %v884 = vrot.slane %v863, 4
        %v885 = vsel %vm672, %v869, %v884
        %v887 = vunpack.c.l.s4 1934713408
        %v888 = vunpack.c.0.s8 %v887
        %v889 = vperm.slane %v883, %v888
        %v891 = vunpack.c.l.s4 1934713408
        %v892 = vunpack.c.0.s8 %v891
        %v893 = vperm.slane %v885, %v892
        %v894 = vrot.slane %v889, 4
        %v895 = vsel %vm672, %v894, %v877
        %v896 = vrot.slane %v877, 4
        %v897 = vsel %vm672, %v889, %v896
        %v898 = vrot.slane %v893, 4
        %v899 = vsel %vm672, %v898, %v881
        %v900 = vrot.slane %v881, 4
        %v901 = vsel %vm672, %v893, %v900
        %902 = vrot.lane.b32.xlu0 %v658, 96
        %v903 = vpop.permute.xlu0 %902
        %904 = vrot.lane.b32.xlu0 %v784, 96
        %v905 = vpop.permute.xlu0 %904
        %906 = vrot.lane.b32.xlu0 %v787, 96
        %v907 = vpop.permute.xlu0 %906
        %908 = vrot.lane.b32.xlu0 %v790, 96
        %v909 = vpop.permute.xlu0 %908
        %v914 = vrot.slane %v907, 4
        %v915 = vsel %vm672, %v914, %v903
        %v916 = vrot.slane %v903, 4
        %v917 = vsel %vm672, %v907, %v916
        %v919 = vunpack.c.l.s4 1983009808
        %v920 = vunpack.c.0.s8 %v919
        %v921 = vperm.slane %v915, %v920
        %v923 = vunpack.c.l.s4 1983009808
        %v924 = vunpack.c.0.s8 %v923
        %v925 = vperm.slane %v917, %v924
        %v926 = vrot.slane %v909, 4
        %v927 = vsel %vm672, %v926, %v905
        %v928 = vrot.slane %v905, 4
        %v929 = vsel %vm672, %v909, %v928
        %v931 = vunpack.c.l.s4 1983009808
        %v932 = vunpack.c.0.s8 %v931
        %v933 = vperm.slane %v927, %v932
        %v935 = vunpack.c.l.s4 1983009808
        %v936 = vunpack.c.0.s8 %v935
        %v937 = vperm.slane %v929, %v936
        %v938 = vrot.slane %v933, 4
        %v939 = vsel %vm672, %v938, %v921
        %v940 = vrot.slane %v921, 4
        %v941 = vsel %vm672, %v933, %v940
        %v943 = vunpack.c.l.s4 1934713408
        %v944 = vunpack.c.0.s8 %v943
        %v945 = vperm.slane %v939, %v944
        %v947 = vunpack.c.l.s4 1934713408
        %v948 = vunpack.c.0.s8 %v947
        %v949 = vperm.slane %v941, %v948
        %v950 = vrot.slane %v937, 4
        %v951 = vsel %vm672, %v950, %v925
        %v952 = vrot.slane %v925, 4
        %v953 = vsel %vm672, %v937, %v952
        %v955 = vunpack.c.l.s4 1934713408
        %v956 = vunpack.c.0.s8 %v955
        %v957 = vperm.slane %v951, %v956
        %v959 = vunpack.c.l.s4 1934713408
        %v960 = vunpack.c.0.s8 %v959
        %v961 = vperm.slane %v953, %v960
        %v962 = vrot.slane %v945, 4
        %v963 = vsel %vm672, 0.0, %v962
        %v964 = vrot.slane %v949, 4
        %v965 = vsel %vm672, 0.0, %v964
        %v966 = vrot.slane %v957, 4
        %v967 = vsel %vm672, 0.0, %v966
        %v968 = vrot.slane %v961, 4
        %v969 = vsel %vm672, 0.0, %v968
        %v970 = vsel %vm672, %v964, %v945
        %v972 = vunpack.c.l.s4 1983009808
        %v973 = vunpack.c.0.s8 %v972
        %v974 = vperm.slane %v970, %v973
        %v975 = vrot.slane %v965, 4
        %v976 = vsel %vm672, %v975, %v963
        %v978 = vunpack.c.l.s4 1983009808
        %v979 = vunpack.c.0.s8 %v978
        %v980 = vperm.slane %v976, %v979
        %v981 = vsel %vm672, %v968, %v957
        %v983 = vunpack.c.l.s4 1983009808
        %v984 = vunpack.c.0.s8 %v983
        %v985 = vperm.slane %v981, %v984
        %v986 = vrot.slane %v969, 4
        %v987 = vsel %vm672, %v986, %v967
        %v989 = vunpack.c.l.s4 1983009808
        %v990 = vunpack.c.0.s8 %v989
        %v991 = vperm.slane %v987, %v990
        %v992 = vrot.slane %v980, 4
        %v993 = vsel %vm672, %v992, %v974
        %v994 = vrot.slane %v974, 4
        %v995 = vsel %vm672, %v980, %v994
        %v997 = vunpack.c.l.s4 1934713408
        %v998 = vunpack.c.0.s8 %v997
        %v999 = vperm.slane %v993, %v998
        %v1001 = vunpack.c.l.s4 1934713408
        %v1002 = vunpack.c.0.s8 %v1001
        %v1003 = vperm.slane %v995, %v1002
        %v1004 = vrot.slane %v991, 4
        %v1005 = vsel %vm672, %v1004, %v985
        %v1006 = vrot.slane %v985, 4
        %v1007 = vsel %vm672, %v991, %v1006
        %v1009 = vunpack.c.l.s4 1934713408
        %v1010 = vunpack.c.0.s8 %v1009
        %v1011 = vperm.slane %v1005, %v1010
        %v1013 = vunpack.c.l.s4 1934713408
        %v1014 = vunpack.c.0.s8 %v1013
        %v1015 = vperm.slane %v1007, %v1014
        %v1016 = vrot.slane %v1011, 4
        %v1017 = vsel %vm672, %v1016, %v999
        %v1018 = vrot.slane %v999, 4
        %v1019 = vsel %vm672, %v1011, %v1018
        %v1020 = vrot.slane %v1015, 4
        %v1021 = vsel %vm672, %v1020, %v1003
        %v1022 = vrot.slane %v1003, 4
        %v1023 = vsel %vm672, %v1015, %v1022
        %v1024 = vpack.c.bf16 %v775, %v775
        %v1025 = vpack.c.bf16 %v777, %v777
        %v1026 = vpack.c.bf16 %v779, %v779
        %v1027 = vpack.c.bf16 %v781, %v781
        %v1028 = vpack.c.bf16 %v895, %v895
        %v1029 = vpack.c.bf16 %v897, %v897
        %v1030 = vpack.c.bf16 %v899, %v899
        %v1031 = vpack.c.bf16 %v901, %v901
        %vm1032 = vcmask 64512
        %v1034 = vsel %vm1032, %v1024, 0
        %v1037 = vsel %vm1032, %v1028, 0
        %1039 = vmatpush.bf16.xpose.msra.mxu0 0
        %1040 = vmatpush.bf16.xpose.msra.mxu0 0
        %1041 = vmatpush.bf16.xpose.msra.mxu0 0
        %1042 = vmatpush.bf16.xpose.msra.mxu0 0
        %1043 = vmatpush.bf16.xpose.msra.mxu0 0
        %1044 = vmatpush.bf16.xpose.msra.mxu0 0
        %1045 = vmatpush.bf16.xpose.msra.mxu0 0
        %1046 = vmatpush.bf16.xpose.msra.mxu0 %v1037
        %1047 = vmatmul.bf16.gmra.mxu0 %v1034
        %v1048 = vpop.f32.mrf.mxu0
        %v1049 = vadd.f32 0.0, %v1048
        %v1050 = vpop.f32.mrf.mxu0
        %1051 = vdwg.mxu0
        %v1053 = vsel %vm1032, %v1025, 0
        %v1056 = vsel %vm1032, %v1029, 0
        %1058 = vmatpush.bf16.xpose.msra.mxu0 0
        %1059 = vmatpush.bf16.xpose.msra.mxu0 0
        %1060 = vmatpush.bf16.xpose.msra.mxu0 0
        %1061 = vmatpush.bf16.xpose.msra.mxu0 0
        %1062 = vmatpush.bf16.xpose.msra.mxu0 0
        %1063 = vmatpush.bf16.xpose.msra.mxu0 0
        %1064 = vmatpush.bf16.xpose.msra.mxu0 0
        %1065 = vmatpush.bf16.xpose.msra.mxu0 %v1056
        %1066 = vmatmul.bf16.gmra.mxu0 %v1053
        %v1067 = vpop.f32.mrf.mxu0
        %v1068 = vadd.f32 0.0, %v1067
        %v1069 = vpop.f32.mrf.mxu0
        %1070 = vdwg.mxu0
        %v1072 = vsel %vm1032, %v1026, 0
        %v1075 = vsel %vm1032, %v1030, 0
        %1077 = vmatpush.bf16.xpose.msra.mxu0 0
        %1078 = vmatpush.bf16.xpose.msra.mxu0 0
        %1079 = vmatpush.bf16.xpose.msra.mxu0 0
        %1080 = vmatpush.bf16.xpose.msra.mxu0 0
        %1081 = vmatpush.bf16.xpose.msra.mxu0 0
        %1082 = vmatpush.bf16.xpose.msra.mxu0 0
        %1083 = vmatpush.bf16.xpose.msra.mxu0 0
        %1084 = vmatpush.bf16.xpose.msra.mxu0 %v1075
        %1085 = vmatmul.bf16.gmra.mxu0 %v1072
        %v1086 = vpop.f32.mrf.mxu0
        %v1087 = vadd.f32 0.0, %v1086
        %v1088 = vpop.f32.mrf.mxu0
        %1089 = vdwg.mxu0
        %v1091 = vsel %vm1032, %v1027, 0
        %v1094 = vsel %vm1032, %v1031, 0
        %1096 = vmatpush.bf16.xpose.msra.mxu0 0
        %1097 = vmatpush.bf16.xpose.msra.mxu0 0
        %1098 = vmatpush.bf16.xpose.msra.mxu0 0
        %1099 = vmatpush.bf16.xpose.msra.mxu0 0
        %1100 = vmatpush.bf16.xpose.msra.mxu0 0
        %1101 = vmatpush.bf16.xpose.msra.mxu0 0
        %1102 = vmatpush.bf16.xpose.msra.mxu0 0
        %1103 = vmatpush.bf16.xpose.msra.mxu0 %v1094
        %1104 = vmatmul.bf16.gmra.mxu0 %v1091
        %v1105 = vpop.f32.mrf.mxu0
        %v1106 = vadd.f32 0.0, %v1105
        %v1107 = vpop.f32.mrf.mxu0
        %1108 = vdwg.mxu0
        %v1109 = vmul.f32 %v1049, 0.35355338
        %v1110 = vmul.f32 %v1068, 0.35355338
        %v1111 = vmul.f32 %v1087, 0.35355338
        %v1112 = vmul.f32 %v1106, 0.35355338
        %v1113 = vld [vmem:[%s471] sm:$0x1]
        %v1115 = vperm.slane %v1113, 0
        %v1117 = vadd.f32 %v1109, %v1115
        %v1118 = vadd.f32 %v1110, %v1115
        %v1119 = vadd.f32 %v1111, %v1115
        %v1120 = vadd.f32 %v1112, %v1115
        %v1121 = vlaneseq
        %v1122 = vshrl.u32 %v1121, 7
        %v1123 = vstv %s531
        %v1124 = vadd.s32 %v1123, %v1122
        %v1125 = vlaneseq
        %v1126 = vand.u32 %v1125, 127
        %vm1127 = vcmp.gt.s32.totalorder %v1126, %v1124
        %v1128 = vsel %vm1127, -1e+09, 0.0
        %v1129 = vadd.f32 %v1117, %v1128
        %v1130 = vadd.f32 %v1118, %v1128
        %v1131 = vadd.f32 %v1119, %v1128
        %v1132 = vadd.f32 %v1120, %v1128
        %v1133 = vsel %vm1032, %v1129, -inf
        %1134 = vmax.xlane.f32.xlu0 %v1133
        %v1135 = vpop.xlane.xlu0 %1134
        %v1136 = vsel %vm1032, %v1130, -inf
        %1137 = vmax.xlane.f32.xlu0 %v1136
        %v1138 = vpop.xlane.xlu0 %1137
        %v1139 = vsel %vm1032, %v1131, -inf
        %1140 = vmax.xlane.f32.xlu0 %v1139
        %v1141 = vpop.xlane.xlu0 %1140
        %v1142 = vsel %vm1032, %v1132, -inf
        %1143 = vmax.xlane.f32.xlu0 %v1142
        %v1144 = vpop.xlane.xlu0 %1143
        %v1145 = vsub.f32 %v1129, %v1135
        %v1146 = vsub.f32 %v1130, %v1138
        %v1147 = vsub.f32 %v1131, %v1141
        %v1148 = vsub.f32 %v1132, %v1144
        %v1149 = vmul.f32 %v1145, 1.442695
        %v1150 = vpow.pop %v1149
        %v1151 = vmul.f32 %v1146, 1.442695
        %v1152 = vpow.pop %v1151
        %v1153 = vmul.f32 %v1147, 1.442695
        %v1154 = vpow.pop %v1153
        %v1155 = vmul.f32 %v1148, 1.442695
        %v1156 = vpow.pop %v1155
        %v1157 = vsel %vm1032, %v1150, 0.0
        %1158 = vadd.xlane.f32.xlu0 %v1157
        %v1159 = vpop.xlane.xlu0 %1158
        %v1160 = vsel %vm1032, %v1152, 0.0
        %1161 = vadd.xlane.f32.xlu0 %v1160
        %v1162 = vpop.xlane.xlu0 %1161
        %v1163 = vsel %vm1032, %v1154, 0.0
        %1164 = vadd.xlane.f32.xlu0 %v1163
        %v1165 = vpop.xlane.xlu0 %1164
        %v1166 = vsel %vm1032, %v1156, 0.0
        %1167 = vadd.xlane.f32.xlu0 %v1166
        %v1168 = vpop.xlane.xlu0 %1167
        %v1169 = vrcp.pop %v1159
        %v1170 = vrcp.pop %v1162
        %v1171 = vrcp.pop %v1165
        %v1172 = vrcp.pop %v1168
        %v1173 = vmul.f32 %v1150, %v1169
        %v1174 = vmul.f32 %v1152, %v1170
        %v1175 = vmul.f32 %v1154, %v1171
        %v1176 = vmul.f32 %v1156, %v1172
        %v1177 = vpack.c.bf16 %v1173, %v1173
        %v1178 = vpack.c.bf16 %v1174, %v1174
        %v1179 = vpack.c.bf16 %v1175, %v1175
        %v1180 = vpack.c.bf16 %v1176, %v1176
        %v1181 = vpack.c.bf16 %v1017, %v1017
        %v1182 = vpack.c.bf16 %v1019, %v1019
        %v1183 = vpack.c.bf16 %v1021, %v1021
        %v1184 = vpack.c.bf16 %v1023, %v1023
        %v1186 = vsel %vm1032, %v1177, 0
        %vm1188 = vcmask 1043456
        %v1190 = vsel %vm1188, %v1181, 0
        %1192 = vmatpush.bf16.msra.mxu0 0
        %1193 = vmatpush.bf16.msra.mxu0 0
        %1194 = vmatpush.bf16.msra.mxu0 0
        %1195 = vmatpush.bf16.msra.mxu0 0
        %1196 = vmatpush.bf16.msra.mxu0 0
        %1197 = vmatpush.bf16.msra.mxu0 0
        %1198 = vmatpush.bf16.msra.mxu0 0
        %1199 = vmatpush.bf16.msra.mxu0 %v1190
        %1200 = vmatmul.bf16.gmra.mxu0 %v1186
        %v1201 = vpop.f32.mrf.mxu0
        %v1202 = vadd.f32 0.0, %v1201
        %v1203 = vpop.f32.mrf.mxu0
        %1204 = vdwg.mxu0
        %v1206 = vsel %vm1032, %v1178, 0
        %v1209 = vsel %vm1188, %v1182, 0
        %1211 = vmatpush.bf16.msra.mxu0 0
        %1212 = vmatpush.bf16.msra.mxu0 0
        %1213 = vmatpush.bf16.msra.mxu0 0
        %1214 = vmatpush.bf16.msra.mxu0 0
        %1215 = vmatpush.bf16.msra.mxu0 0
        %1216 = vmatpush.bf16.msra.mxu0 0
        %1217 = vmatpush.bf16.msra.mxu0 0
        %1218 = vmatpush.bf16.msra.mxu0 %v1209
        %1219 = vmatmul.bf16.gmra.mxu0 %v1206
        %v1220 = vpop.f32.mrf.mxu0
        %v1221 = vadd.f32 0.0, %v1220
        %v1222 = vpop.f32.mrf.mxu0
        %1223 = vdwg.mxu0
        %v1225 = vsel %vm1032, %v1179, 0
        %v1228 = vsel %vm1188, %v1183, 0
        %1230 = vmatpush.bf16.msra.mxu0 0
        %1231 = vmatpush.bf16.msra.mxu0 0
        %1232 = vmatpush.bf16.msra.mxu0 0
        %1233 = vmatpush.bf16.msra.mxu0 0
        %1234 = vmatpush.bf16.msra.mxu0 0
        %1235 = vmatpush.bf16.msra.mxu0 0
        %1236 = vmatpush.bf16.msra.mxu0 0
        %1237 = vmatpush.bf16.msra.mxu0 %v1228
        %1238 = vmatmul.bf16.gmra.mxu0 %v1225
        %v1239 = vpop.f32.mrf.mxu0
        %v1240 = vadd.f32 0.0, %v1239
        %v1241 = vpop.f32.mrf.mxu0
        %1242 = vdwg.mxu0
        %v1244 = vsel %vm1032, %v1180, 0
        %v1247 = vsel %vm1188, %v1184, 0
        %1249 = vmatpush.bf16.msra.mxu0 0
        %1250 = vmatpush.bf16.msra.mxu0 0
        %1251 = vmatpush.bf16.msra.mxu0 0
        %1252 = vmatpush.bf16.msra.mxu0 0
        %1253 = vmatpush.bf16.msra.mxu0 0
        %1254 = vmatpush.bf16.msra.mxu0 0
        %1255 = vmatpush.bf16.msra.mxu0 0
        %1256 = vmatpush.bf16.msra.mxu0 %v1247
        %1257 = vmatmul.bf16.gmra.mxu0 %v1244
        %v1258 = vpop.f32.mrf.mxu0
        %v1259 = vadd.f32 0.0, %v1258
        %v1260 = vpop.f32.mrf.mxu0
        %1261 = vdwg.mxu0
        %v1262 = vrot.slane %v1240, 4
        %v1263 = vsel %vm672, %v1262, %v1202
        %v1264 = vrot.slane %v1202, 4
        %v1265 = vsel %vm672, %v1240, %v1264
        %v1267 = vunpack.c.l.s4 1983009808
        %v1268 = vunpack.c.0.s8 %v1267
        %v1269 = vperm.slane %v1263, %v1268
        %v1271 = vunpack.c.l.s4 1983009808
        %v1272 = vunpack.c.0.s8 %v1271
        %v1273 = vperm.slane %v1265, %v1272
        %v1274 = vrot.slane %v1259, 4
        %v1275 = vsel %vm672, %v1274, %v1221
        %v1276 = vrot.slane %v1221, 4
        %v1277 = vsel %vm672, %v1259, %v1276
        %v1279 = vunpack.c.l.s4 1983009808
        %v1280 = vunpack.c.0.s8 %v1279
        %v1281 = vperm.slane %v1275, %v1280
        %v1283 = vunpack.c.l.s4 1983009808
        %v1284 = vunpack.c.0.s8 %v1283
        %v1285 = vperm.slane %v1277, %v1284
        %v1286 = vrot.slane %v1281, 4
        %v1287 = vsel %vm672, %v1286, %v1269
        %v1288 = vrot.slane %v1269, 4
        %v1289 = vsel %vm672, %v1281, %v1288
        %v1291 = vunpack.c.l.s4 1934713408
        %v1292 = vunpack.c.0.s8 %v1291
        %v1293 = vperm.slane %v1287, %v1292
        %v1295 = vunpack.c.l.s4 1934713408
        %v1296 = vunpack.c.0.s8 %v1295
        %v1297 = vperm.slane %v1289, %v1296
        %v1298 = vrot.slane %v1285, 4
        %v1299 = vsel %vm672, %v1298, %v1273
        %v1300 = vrot.slane %v1273, 4
        %v1301 = vsel %vm672, %v1285, %v1300
        %v1303 = vunpack.c.l.s4 1934713408
        %v1304 = vunpack.c.0.s8 %v1303
        %v1305 = vperm.slane %v1299, %v1304
        %v1307 = vunpack.c.l.s4 1934713408
        %v1308 = vunpack.c.0.s8 %v1307
        %v1309 = vperm.slane %v1301, %v1308
        %v1310 = vrot.slane %v1293, 4
        %v1311 = vsel %vm672, 0.0, %v1310
        %v1312 = vrot.slane %v1297, 4
        %v1313 = vsel %vm672, 0.0, %v1312
        %v1314 = vrot.slane %v1305, 4
        %v1315 = vsel %vm672, 0.0, %v1314
        %v1316 = vrot.slane %v1309, 4
        %v1317 = vsel %vm672, 0.0, %v1316
        %v1318 = vsel %vm672, %v1312, %v1293
        %v1320 = vunpack.c.l.s4 1983009808
        %v1321 = vunpack.c.0.s8 %v1320
        %v1322 = vperm.slane %v1318, %v1321
        %v1323 = vrot.slane %v1313, 4
        %v1324 = vsel %vm672, %v1323, %v1311
        %v1326 = vunpack.c.l.s4 1983009808
        %v1327 = vunpack.c.0.s8 %v1326
        %v1328 = vperm.slane %v1324, %v1327
        %v1329 = vsel %vm672, %v1316, %v1305
        %v1331 = vunpack.c.l.s4 1983009808
        %v1332 = vunpack.c.0.s8 %v1331
        %v1333 = vperm.slane %v1329, %v1332
        %v1334 = vrot.slane %v1317, 4
        %v1335 = vsel %vm672, %v1334, %v1315
        %v1337 = vunpack.c.l.s4 1983009808
        %v1338 = vunpack.c.0.s8 %v1337
        %v1339 = vperm.slane %v1335, %v1338
        %v1340 = vrot.slane %v1328, 4
        %v1341 = vsel %vm672, %v1340, %v1322
        %v1342 = vrot.slane %v1322, 4
        %v1343 = vsel %vm672, %v1328, %v1342
        %v1345 = vunpack.c.l.s4 1934713408
        %v1346 = vunpack.c.0.s8 %v1345
        %v1347 = vperm.slane %v1341, %v1346
        %v1349 = vunpack.c.l.s4 1934713408
        %v1350 = vunpack.c.0.s8 %v1349
        %v1351 = vperm.slane %v1343, %v1350
        %v1352 = vrot.slane %v1339, 4
        %v1353 = vsel %vm672, %v1352, %v1333
        %v1354 = vrot.slane %v1333, 4
        %v1355 = vsel %vm672, %v1339, %v1354
        %v1357 = vunpack.c.l.s4 1934713408
        %v1358 = vunpack.c.0.s8 %v1357
        %v1359 = vperm.slane %v1353, %v1358
        %v1361 = vunpack.c.l.s4 1934713408
        %v1362 = vunpack.c.0.s8 %v1361
        %v1363 = vperm.slane %v1355, %v1362
        %v1364 = vrot.slane %v1359, 4
        %v1365 = vsel %vm672, %v1364, %v1347
        %v1366 = vrot.slane %v1347, 4
        %v1367 = vsel %vm672, %v1359, %v1366
        %v1368 = vrot.slane %v1363, 4
        %v1369 = vsel %vm672, %v1368, %v1351
        %v1370 = vrot.slane %v1351, 4
        %v1371 = vsel %vm672, %v1363, %v1370
        %1373 = vrot.lane.b32.xlu0 %v1367, 8
        %v1374 = vpop.permute.xlu0 %1373
        %1377 = vrot.lane.b32.xlu0 %v1369, 16
        %v1378 = vpop.permute.xlu0 %1377
        %1381 = vrot.lane.b32.xlu0 %v1371, 24
        %v1382 = vpop.permute.xlu0 %1381
        %v1384 = vsel %vm1032, %v1365, %v1374
        %vm1385 = vcmask 130048
        %v1386 = vsel %vm1385, %v1384, %v1378
        %vm1387 = vcmask 195584
        %v1388 = vsel %vm1387, %v1386, %v1382
        %v1389 = vpack.c.bf16 %v1388, %v1388
        %v1390 = vld [vmem:[%s6] sm:$0xf]
        %v1391 = vld [vmem:[%s6 + $0x4] sm:$0xf]
        %v1392 = vld [vmem:[%s6 + $0x8] sm:$0xf]
        %v1393 = vld [vmem:[%s6 + $0xc] sm:$0xf]
        %v1394 = vld [vmem:[%s7] sm:$0x1]
        %v1396 = vperm.slane %v1394, 0
        %v1402 = vunpack.c.l.b16 %v1390
        %v1403 = vunpack.c.l.b16 %v1391
        %v1404 = vunpack.c.l.b16 %v1392
        %v1405 = vunpack.c.l.b16 %v1393
        %v1406 = vpack.c.b16 %v1403, %v1402
        %v1407 = vpack.c.b16 %v1405, %v1404
        %v1411 = vsel %vm536, %v1389, 0
        %1413 = vmatpush.bf16.msra.mxu0 0
        %1414 = vmatpush.bf16.msra.mxu0 0
        %1415 = vmatpush.bf16.msra.mxu0 0
        %1416 = vmatpush.bf16.msra.mxu0 0
        %1417 = vmatpush.bf16.msra.mxu0 0
        %1418 = vmatpush.bf16.msra.mxu0 0
        %1419 = vmatpush.bf16.msra.mxu0 %v1407
        %1420 = vmatpush.bf16.msra.mxu0 %v1406
        %1421 = vmatmul.bf16.gmra.mxu0 %v1411
        %v1422 = vpop.f32.mrf.mxu0
        %v1423 = vadd.f32 %v1396, %v1422
        %v1424 = vpop.f32.mrf.mxu0
        %1425 = vdwg.mxu0
        %v1426 = vadd.f32 %v533, %v1423
        %v1427 = vld [vmem:[%s8] sm:$0x1]
        %v1428 = vld [vmem:[%s9] sm:$0x1]
        %v1429 = vsel %vm536, %v1426, 0.0
        %1430 = vadd.xlane.f32.xlu0 %v1429
        %v1431 = vpop.xlane.xlu0 %1430
        %v1432 = vmul.f32 %v1431, %v546
        %v1433 = vsub.f32 %v1426, %v1432
        %v1434 = vmul.f32 %v1433, %v1433
        %v1435 = vsel %vm536, %v1434, 0.0
        %1436 = vadd.xlane.f32.xlu0 %v1435
        %v1437 = vpop.xlane.xlu0 %1436
        %v1438 = vmul.f32 %v1437, %v546
        %v1439 = vadd.f32 %v1438, 1e-05
        %v1440 = vrsqrt.pop %v1439
        %v1441 = vmul.f32 %v1440, %v1439
        %v1442 = vmul.f32 %v1441, %v1440
        %v1443 = vmul.f32 0.5, %v1442
        %v1444 = vsub.f32 1.5, %v1443
        %v1445 = vmul.f32 %v1440, %v1444
        %vm1446 = vweird.f32 %v1439
        %vm1447 = vweird.f32 %v1440
        %vm1448 = vmor %vm1446, %vm1447
        %v1449 = vsel %vm1448, %v1440, %v1445
        %v1450 = vmul.f32 %v1433, %v1449
        %v1452 = vperm.slane %v1427, 0
        %v1454 = vmul.f32 %v1450, %v1452
        %v1456 = vperm.slane %v1428, 0
        %v1458 = vadd.f32 %v1454, %v1456
        %v1459 = vpack.c.bf16 %v1458, %v1458
        %v1460 = vld [vmem:[#allocation5] sm:$0xf]
        %v1461 = vld [vmem:[#allocation5 + $0x4] sm:$0xf]
        %v1462 = vld [vmem:[#allocation5 + $0x8] sm:$0xf]
        %v1463 = vld [vmem:[#allocation5 + $0xc] sm:$0xf]
        %v1464 = vld [vmem:[%s11] sm:$0x1]
        %v1466 = vperm.slane %v1464, 0
        %v1472 = vunpack.c.l.b16 %v1460
        %v1473 = vunpack.c.l.b16 %v1461
        %v1474 = vunpack.c.l.b16 %v1462
        %v1475 = vunpack.c.l.b16 %v1463
        %v1476 = vpack.c.b16 %v1473, %v1472
        %v1477 = vpack.c.b16 %v1475, %v1474
        %v1481 = vsel %vm536, %v1459, 0
        %1483 = vmatpush.bf16.msra.mxu0 0
        %1484 = vmatpush.bf16.msra.mxu0 0
        %1485 = vmatpush.bf16.msra.mxu0 0
        %1486 = vmatpush.bf16.msra.mxu0 0
        %1487 = vmatpush.bf16.msra.mxu0 0
        %1488 = vmatpush.bf16.msra.mxu0 0
        %1489 = vmatpush.bf16.msra.mxu0 %v1477
        %1490 = vmatpush.bf16.msra.mxu0 %v1476
        %1491 = vmatmul.bf16.gmra.mxu0 %v1481
        %v1492 = vpop.f32.mrf.mxu0
        %v1493 = vadd.f32 %v1466, %v1492
        %v1494 = vpop.f32.mrf.mxu0
        %1495 = vdwg.mxu0
        %v1496 = vmax.f32 %v1493, 0.0
        %v1497 = vpack.c.bf16 %v1496, %v1496
        %v1498 = vld [vmem:[%s12] sm:$0xf]
        %v1499 = vld [vmem:[%s12 + $0x4] sm:$0xf]
        %v1500 = vld [vmem:[%s12 + $0x8] sm:$0xf]
        %v1501 = vld [vmem:[%s12 + $0xc] sm:$0xf]
        %v1502 = vld [vmem:[%s12 + $0x10] sm:$0xf]
        %v1503 = vld [vmem:[%s12 + $0x14] sm:$0xf]
        %v1504 = vld [vmem:[%s12 + $0x18] sm:$0xf]
        %v1505 = vld [vmem:[%s12 + $0x1c] sm:$0xf]
        %v1506 = vld [vmem:[%s13] sm:$0x1]
        %v1508 = vperm.slane %v1506, 0
        %v1518 = vunpack.c.l.b16 %v1498
        %v1519 = vunpack.c.l.b16 %v1499
        %v1520 = vunpack.c.l.b16 %v1500
        %v1521 = vunpack.c.l.b16 %v1501
        %v1522 = vunpack.c.l.b16 %v1502
        %v1523 = vunpack.c.l.b16 %v1503
        %v1524 = vunpack.c.l.b16 %v1504
        %v1525 = vunpack.c.l.b16 %v1505
        %v1526 = vpack.c.b16 %v1519, %v1518
        %v1527 = vpack.c.b16 %v1521, %v1520
        %v1528 = vpack.c.b16 %v1523, %v1522
        %v1529 = vpack.c.b16 %v1525, %v1524
        %vm1534 = vcmask 523264
        %v1536 = vsel %vm1534, %v1497, 0
        %1538 = vmatpush.bf16.msra.mxu0 0
        %1539 = vmatpush.bf16.msra.mxu0 0
        %1540 = vmatpush.bf16.msra.mxu0 0
        %1541 = vmatpush.bf16.msra.mxu0 0
        %1542 = vmatpush.bf16.msra.mxu0 %v1529
        %1543 = vmatpush.bf16.msra.mxu0 %v1528
        %1544 = vmatpush.bf16.msra.mxu0 %v1527
        %1545 = vmatpush.bf16.msra.mxu0 %v1526
        %1546 = vmatmul.bf16.gmra.mxu0 %v1536
        %v1547 = vpop.f32.mrf.mxu0
        %v1548 = vadd.f32 %v1508, %v1547
        %v1549 = vpop.f32.mrf.mxu0
        %1550 = vdwg.mxu0
        %v1551 = vadd.f32 %v1426, %v1548
        %1552 = vst.msk [vmem:[%s524] sm:$0xff] %vm536, %v1551
        %s1553 = sand.u32 %s358, 1
        %s1554 = scalar_lea.sflag [#allocation4], %s1553
        %s1555 = sand.u32 %s358, 1
        %s1556 = smul.addr %s1555, 8
        %s1557 = scalar_lea.vmem [#allocation7], %s1556
        // Predicated region
        $region85: #{tpu_custom_call.1} parent=75 // pred_check
          %p1558 = pneg %p368
        $region86: #{tpu_custom_call.1} parent=75 // pred_check_branch
          %1560 = sbr.rel (%p1558) target = $region88
        $region87: #{tpu_custom_call.1} parent=75 // pred_region
          %1562 = vsyncadd %s1554, 0
          %s1563 = sadd.s32 %s37, %s36
          %s1564 = smul.addr %s1563, 8
          %s1565 = scalar_lea.hbm %s14, %s1564
          %s1567 = sshll.u32 %s1557, 4
          %s1568 = int_to_ptr.vmem [resolvable:$true] %s1567
          %s1569 = sshll.u32 %s1565, 4
          %s1570 = int_to_ptr.hbm [resolvable:$true] %s1569
          %1572 = dma.vmem_to_hbm [thread:$0]  %s1568, 128, %s1570, %s1554
        $region88: #{tpu_custom_call.1} parent=75 // pred_fallthru
          _
      $region76: #{tpu_custom_call.1} parent=5 // pred_fallthru
        _
      %p1573 = scmp.le.s32.totalorder 2, %s27
      // Predicated region
      $region89: #{tpu_custom_call.1} parent=5 // pred_check
        %p1574 = pneg %p1573
      $region90: #{tpu_custom_call.1} parent=5 // pred_check_branch
        %1576 = sbr.rel (%p1574) target = $region92
      $region91: #{tpu_custom_call.1} parent=5 // pred_region
        %s1577 = ssub.s32 %s27, 2
        // Predicated region
        $region93: #{tpu_custom_call.1} parent=91 // pred_check
          %p1578 = pneg %p374
        $region94: #{tpu_custom_call.1} parent=91 // pred_check_branch
          %1580 = sbr.rel (%p1578) target = $region96
        $region95: #{tpu_custom_call.1} parent=91 // pred_region
          %s1581 = sand.u32 %s359, 1
          %s1582 = scalar_lea.sflag [#allocation4], %s1581
          %s1583 = sand.u32 %s359, 1
          %s1584 = smul.addr %s1583, 8
          %s1585 = scalar_lea.vmem [#allocation7], %s1584
          %1587 = dma.done %s1582, 128
        $region96: #{tpu_custom_call.1} parent=91 // pred_fallthru
          _
      $region92: #{tpu_custom_call.1} parent=5 // pred_fallthru
        _
    $region6: #{tpu_custom_call.1} parent=1 // loop_footer
      %s31 = sadd.s32 1, %s27
    $region7: #{tpu_custom_call.1} parent=1 // loop_footer_branch
      %26 = sbr.rel target = $region3
    $region8: #{tpu_custom_call.1} parent=1 // loop_exit
      _
    %1588 = vsyncpa [#allocation3], 1
    %s1589 = scalar_lea.sflag [#allocation3], 1
    %1590 = vsyncpa %s1589, 1
    %1591 = vsyncpa [#allocation6], 1
    %1592 = vsyncpa [#allocation4], 1
    %s1593 = scalar_lea.sflag [#allocation4], 1
    %1594 = vsyncpa %s1593, 1

</llo_original>
